<compile_context>
chip_gen: v5e
topology: v5e:2x2
jax: 0.10.0
libtpu: 0.0.40
codegen_flags: <defaults>
</compile_context>

<pallas_src>
import functools

import jax
import jax.numpy as jnp
from jax import lax
from jax.experimental import pallas as pl
from jax.experimental.pallas import tpu as pltpu

LANE = 128


def _round_up(n, m):
    return ((n + m - 1) // m) * m


def _pad2(a, rows, cols):
    return jnp.pad(a, ((0, rows - a.shape[0]), (0, cols - a.shape[1])))


# ---------------------------------------------------------------------------
# Fused kernel: both VAE encoders + reparameterization + sim + min-max norm.
# ---------------------------------------------------------------------------
def _encode(x, eps, w1, b1, w2, b2, w3, b3, wmu, bmu, wlv, blv):
    """4-layer MLP encoder + reparameterization. Matmul operands may be bf16;
    accumulation and the bias/ReLU/exp epilogue are f32."""
    h = jnp.dot(x, w1[...], preferred_element_type=jnp.float32)
    h = jnp.maximum(h + b1[...], 0.0)
    h = jnp.dot(h.astype(w2.dtype), w2[...], preferred_element_type=jnp.float32)
    h = jnp.maximum(h + b2[...], 0.0)
    h = jnp.dot(h.astype(w3.dtype), w3[...], preferred_element_type=jnp.float32)
    h = jnp.maximum(h + b3[...], 0.0)
    h = h.astype(wmu.dtype)
    mu = jnp.dot(h, wmu[...], preferred_element_type=jnp.float32) + bmu[...]
    lv = jnp.dot(h, wlv[...], preferred_element_type=jnp.float32) + blv[...]
    std = jnp.exp(0.5 * lv)                    # EUP; padded cols: exp(0) = 1
    # padded latent cols: mu = 0, eps = 0  ->  z = 0 (exact), so the 128-wide
    # latent contraction in the sim matmul is unaffected by lane padding.
    return mu + eps * std                      # f32


def _fused_kernel(b_mic, b_dis,
                  mx_ref, me_ref, dx_ref, de_ref,
                  mw1, mb1, mw2, mb2, mw3, mb3, mwmu, mbmu, mwlv, mblv,
                  dw1, db1, dw2, db2, dw3, db3, dwmu, dbmu, dwlv, dblv,
                  o_ref):
    zm = _encode(mx_ref[...], me_ref[...],
                 mw1, mb1, mw2, mb2, mw3, mb3, mwmu, mbmu, mwlv, mblv)
    zd = _encode(dx_ref[...], de_ref[...],
                 dw1, db1, dw2, db2, dw3, db3, dwmu, dbmu, dwlv, dblv)

    # S = z_mic @ z_dis.T  (f32 MXU; contraction axis = lane-padded latent).
    s = lax.dot_general(zm, zd,
                        dimension_numbers=(((1,), (1,)), ((), ())),
                        preferred_element_type=jnp.float32)

    # Padded batch rows/cols hold garbage (bias/ReLU chain of zero-padded rows):
    # mask them out of the global min/max; the wrapper slices them off the output.
    rows = lax.broadcasted_iota(jnp.int32, s.shape, 0)
    cols = lax.broadcasted_iota(jnp.int32, s.shape, 1)
    valid = (rows < b_mic) & (cols < b_dis)
    smax = jnp.max(jnp.max(jnp.where(valid, s, -jnp.inf), axis=1, keepdims=True),
                   axis=0, keepdims=True)
    smin = jnp.min(jnp.min(jnp.where(valid, s, jnp.inf), axis=1, keepdims=True),
                   axis=0, keepdims=True)
    # NOTE: no epsilon in the denominator, matching the PyTorch reference.
    o_ref[...] = ((s - smin) / (smax - smin)).astype(o_ref.dtype)


def micro_disease_forward(mic_x, dis_x, mic_params, dis_params, eps_mic, eps_dis):
    """mic_x:(Bm,mic_dim), dis_x:(Bd,dis_dim), eps_*: (B, latent_dim).
    mic_params/dis_params: output of prepare_encoder_params.
    Returns normalized similarity (Bm, Bd) f32."""
    b_mic, b_dis = mic_x.shape[0], dis_x.shape[0]
    cdt = mic_params[0].dtype                      # matmul-operand dtype
    row_m = 16 if cdt == jnp.bfloat16 else 8       # bf16 packs 2 rows/sublane
    bm_p, bd_p = _round_up(b_mic, row_m), _round_up(b_dis, row_m)

    in_mic_pad = mic_params[0].shape[0]
    in_dis_pad = dis_params[0].shape[0]
    latent_pad = mic_params[6].shape[1]

    mic_xp = _pad2(mic_x.astype(cdt), bm_p, in_mic_pad)
    dis_xp = _pad2(dis_x.astype(cdt), bd_p, in_dis_pad)
    eps_mp = _pad2(eps_mic.astype(jnp.float32), bm_p, latent_pad)
    eps_dp = _pad2(eps_dis.astype(jnp.float32), bd_p, latent_pad)

    def enc_flops(bp, p):
        w1, _, w2, _, w3, _, wmu, _, wlv, _ = p
        return 2 * bp * (w1.shape[0] * w1.shape[1] + w2.shape[0] * w2.shape[1]
                         + w3.shape[0] * w3.shape[1]
                         + wmu.shape[0] * wmu.shape[1]
                         + wlv.shape[0] * wlv.shape[1])

    flops = (enc_flops(bm_p, mic_params) + enc_flops(bd_p, dis_params)
             + 2 * bm_p * bd_p * latent_pad)
    bytes_accessed = sum(int(a.size) * a.dtype.itemsize
                         for a in (mic_xp, dis_xp, eps_mp, eps_dp,
                                   *mic_params, *dis_params)) + bm_p * bd_p * 4
    cost = pl.CostEstimate(flops=flops,
                           transcendentals=(bm_p + bd_p) * latent_pad,
                           bytes_accessed=bytes_accessed)

    vmem = pl.BlockSpec(memory_space=pltpu.MemorySpace.VMEM)
    n_inputs = 4 + len(mic_params) + len(dis_params)

    out_p = pl.pallas_call(
        functools.partial(_fused_kernel, b_mic, b_dis),
        out_shape=jax.ShapeDtypeStruct((bm_p, bd_p), jnp.float32),
        in_specs=[vmem] * n_inputs,
        out_specs=vmem,
        cost_estimate=cost,
    )(mic_xp, eps_mp, dis_xp, eps_dp, *mic_params, *dis_params)
    return out_p[:b_mic, :b_dis]


# ---------------------------------------------------------------------------
# Parameters (nn.Linear-style init, stored pre-transposed as (in, out)).
# ---------------------------------------------------------------------------
def _init_linear(key, fan_in, fan_out, dtype=jnp.float32):
    kw, kb = jax.random.split(key)
    bound = 1.0 / (fan_in ** 0.5)
    w = jax.random.uniform(kw, (fan_in, fan_out), dtype, -bound, bound)
    b = jax.random.uniform(kb, (1, fan_out), dtype, -bound, bound)
    return w, b


def init_encoder_params(key, input_dim, latent_dim, dtype=jnp.float32):
    k1, k2, k3, k4 = jax.random.split(key, 4)
    w1, b1 = _init_linear(k1, input_dim, 512, dtype)
    w2, b2 = _init_linear(k2, 512, 256, dtype)
    w3, b3 = _init_linear(k3, 256, 64, dtype)
    w4, b4 = _init_linear(k4, 64, 2 * latent_dim, dtype)
    return (w1, b1, w2, b2, w3, b3, w4, b4)


def prepare_encoder_params(raw, latent_dim, compute_dtype=jnp.bfloat16):
    """Pad feature dims to multiples of 128, split the last layer into mu /
    log_var halves, cast matmul operands to compute_dtype (bf16 default for
    v6e/v7x MXU throughput); biases stay f32 (f32 epilogue)."""
    w1, b1, w2, b2, w3, b3, w4, b4 = raw
    in_pad = _round_up(w1.shape[0], LANE)
    h3_pad = _round_up(w3.shape[1], LANE)          # 64 -> 128
    latent_pad = _round_up(latent_dim, LANE)       # -> 128 (lane-dense latent)

    wmu, wlv = w4[:, :latent_dim], w4[:, latent_dim:]
    bmu, blv = b4[:, :latent_dim], b4[:, latent_dim:]

    return (
        _pad2(w1, in_pad, w1.shape[1]).astype(compute_dtype), b1.astype(jnp.float32),
        w2.astype(compute_dtype),                              b2.astype(jnp.float32),
        _pad2(w3, w3.shape[0], h3_pad).astype(compute_dtype),
        _pad2(b3, 1, h3_pad).astype(jnp.float32),
        _pad2(wmu, h3_pad, latent_pad).astype(compute_dtype),
        _pad2(bmu, 1, latent_pad).astype(jnp.float32),
        _pad2(wlv, h3_pad, latent_pad).astype(compute_dtype),
        _pad2(blv, 1, latent_pad).astype(jnp.float32),
    )


# ---------------------------------------------------------------------------
# Pure-JAX reference of the same forward pass (same explicit eps).
# ---------------------------------------------------------------------------
def reference_forward(mic_x, dis_x, mic_raw, dis_raw, eps_mic, eps_dis, latent_dim):
    def enc(x, p, eps):
        w1, b1, w2, b2, w3, b3, w4, b4 = p
        h = jnp.maximum(x @ w1 + b1, 0.0)
        h = jnp.maximum(h @ w2 + b2, 0.0)
        h = jnp.maximum(h @ w3 + b3, 0.0)
        out = h @ w4 + b4
        mu, lv = out[:, :latent_dim], out[:, latent_dim:]
        return mu + eps * jnp.exp(0.5 * lv)
    zm = enc(mic_x, mic_raw, eps_mic)
    zd = enc(dis_x, dis_raw, eps_dis)
    s = zm @ zd.T
    return (s - s.min()) / (s.max() - s.min())


if __name__ == "__main__":
    # Shapes consistent with MicroDiseaseModel_v2(mic_dim, dis_dim, latent_dim)
    mic_input_dim, dis_input_dim, latent_dim = 200, 96, 32
    B_mic, B_dis = 16, 8

    key = jax.random.PRNGKey(0)
    k_mx, k_dx, k_mp, k_dp, k_em, k_ed = jax.random.split(key, 6)
    mic_x = jax.random.normal(k_mx, (B_mic, mic_input_dim), jnp.float32)
    dis_x = jax.random.normal(k_dx, (B_dis, dis_input_dim), jnp.float32)
    # torch.randn_like eps made explicit / deterministic:
    eps_mic = jax.random.normal(k_em, (B_mic, latent_dim), jnp.float32)
    eps_dis = jax.random.normal(k_ed, (B_dis, latent_dim), jnp.float32)

    mic_raw = init_encoder_params(k_mp, mic_input_dim, latent_dim)
    dis_raw = init_encoder_params(k_dp, dis_input_dim, latent_dim)
    ref = reference_forward(mic_x, dis_x, mic_raw, dis_raw,
                            eps_mic, eps_dis, latent_dim)

    # --- f32 MXU-operand path: strict check ---------------------------------
    mic_f32 = prepare_encoder_params(mic_raw, latent_dim, jnp.float32)
    dis_f32 = prepare_encoder_params(dis_raw, latent_dim, jnp.float32)
    out_f32 = jax.block_until_ready(
        micro_disease_forward(mic_x, dis_x, mic_f32, dis_f32, eps_mic, eps_dis))
    assert out_f32.shape == (B_mic, B_dis)
    assert bool(jnp.all(jnp.isfinite(out_f32)))
    err_f32 = float(jnp.max(jnp.abs(out_f32 - ref)))
    assert jnp.allclose(out_f32, ref, atol=1e-3, rtol=1e-3), err_f32

    # --- bf16 MXU-operand path (default; f32 accumulate/epilogue) -----------
    mic_bf16 = prepare_encoder_params(mic_raw, latent_dim)   # bf16 default
    dis_bf16 = prepare_encoder_params(dis_raw, latent_dim)
    out_bf16 = jax.block_until_ready(
        micro_disease_forward(mic_x, dis_x, mic_bf16, dis_bf16, eps_mic, eps_dis))
    assert out_bf16.shape == (B_mic, B_dis)
    assert bool(jnp.all(jnp.isfinite(out_bf16)))
    err_bf16 = float(jnp.max(jnp.abs(out_bf16 - ref)))
    # Loosened tolerance for bf16 operands (output is min-max normalized to [0,1]).
    assert jnp.allclose(out_bf16, ref, atol=5e-2, rtol=0.0), err_bf16

    print("KERNEL_OK")
</pallas_src>

<mosaic_0001>
module attributes {stable_mosaic.version = 11 : i64} {
  func.func @_fused_kernel(%arg0: memref<16x256xf32, #tpu.memory_space<vmem>>, %arg1: memref<16x128xf32, #tpu.memory_space<vmem>>, %arg2: memref<8x128xf32, #tpu.memory_space<vmem>>, %arg3: memref<8x128xf32, #tpu.memory_space<vmem>>, %arg4: memref<256x512xf32, #tpu.memory_space<vmem>>, %arg5: memref<1x512xf32, #tpu.memory_space<vmem>>, %arg6: memref<512x256xf32, #tpu.memory_space<vmem>>, %arg7: memref<1x256xf32, #tpu.memory_space<vmem>>, %arg8: memref<256x128xf32, #tpu.memory_space<vmem>>, %arg9: memref<1x128xf32, #tpu.memory_space<vmem>>, %arg10: memref<128x128xf32, #tpu.memory_space<vmem>>, %arg11: memref<1x128xf32, #tpu.memory_space<vmem>>, %arg12: memref<128x128xf32, #tpu.memory_space<vmem>>, %arg13: memref<1x128xf32, #tpu.memory_space<vmem>>, %arg14: memref<128x512xf32, #tpu.memory_space<vmem>>, %arg15: memref<1x512xf32, #tpu.memory_space<vmem>>, %arg16: memref<512x256xf32, #tpu.memory_space<vmem>>, %arg17: memref<1x256xf32, #tpu.memory_space<vmem>>, %arg18: memref<256x128xf32, #tpu.memory_space<vmem>>, %arg19: memref<1x128xf32, #tpu.memory_space<vmem>>, %arg20: memref<128x128xf32, #tpu.memory_space<vmem>>, %arg21: memref<1x128xf32, #tpu.memory_space<vmem>>, %arg22: memref<128x128xf32, #tpu.memory_space<vmem>>, %arg23: memref<1x128xf32, #tpu.memory_space<vmem>>, %arg24: memref<16x8xf32, #tpu.memory_space<vmem>>) attributes {dimension_semantics = [], scalar_prefetch = 0 : i64, scratch_operands = 0 : i64, tpu.core_type = #tpu.core_type<tc>} {
    %c0 = arith.constant 0 : index
    %c0_0 = arith.constant 0 : index
    %0 = vector.load %arg0[%c0, %c0_0] : memref<16x256xf32, #tpu.memory_space<vmem>>, vector<16x256xf32>
    %c0_1 = arith.constant 0 : index
    %c0_2 = arith.constant 0 : index
    %1 = vector.load %arg1[%c0_1, %c0_2] : memref<16x128xf32, #tpu.memory_space<vmem>>, vector<16x128xf32>
    %c0_3 = arith.constant 0 : index
    %c0_4 = arith.constant 0 : index
    %2 = vector.load %arg4[%c0_3, %c0_4] : memref<256x512xf32, #tpu.memory_space<vmem>>, vector<256x512xf32>
    %cst = arith.constant dense<0.000000e+00> : vector<16x512xf32>
    %3 = tpu.matmul %0, %2, %cst {dimension_numbers = #tpu.dot_dimension_numbers<[1], [0], [0], [1], [0, 0, 1, 1], [], []>} : vector<16x256xf32>, vector<256x512xf32>, vector<16x512xf32> -> vector<16x512xf32>
    %c0_5 = arith.constant 0 : index
    %c0_6 = arith.constant 0 : index
    %4 = vector.load %arg5[%c0_5, %c0_6] : memref<1x512xf32, #tpu.memory_space<vmem>>, vector<1x512xf32>
    %5 = vector.broadcast %4 : vector<1x512xf32> to vector<16x512xf32>
    %6 = arith.addf %3, %5 : vector<16x512xf32>
    %cst_7 = arith.constant 0.000000e+00 : f32
    %7 = vector.broadcast %cst_7 : f32 to vector<16x512xf32>
    %8 = arith.maximumf %6, %7 : vector<16x512xf32>
    %c0_8 = arith.constant 0 : index
    %c0_9 = arith.constant 0 : index
    %9 = vector.load %arg6[%c0_8, %c0_9] : memref<512x256xf32, #tpu.memory_space<vmem>>, vector<512x256xf32>
    %cst_10 = arith.constant dense<0.000000e+00> : vector<16x256xf32>
    %10 = tpu.matmul %8, %9, %cst_10 {dimension_numbers = #tpu.dot_dimension_numbers<[1], [0], [0], [1], [0, 0, 1, 1], [], []>} : vector<16x512xf32>, vector<512x256xf32>, vector<16x256xf32> -> vector<16x256xf32>
    %c0_11 = arith.constant 0 : index
    %c0_12 = arith.constant 0 : index
    %11 = vector.load %arg7[%c0_11, %c0_12] : memref<1x256xf32, #tpu.memory_space<vmem>>, vector<1x256xf32>
    %12 = vector.broadcast %11 : vector<1x256xf32> to vector<16x256xf32>
    %13 = arith.addf %10, %12 : vector<16x256xf32>
    %cst_13 = arith.constant 0.000000e+00 : f32
    %14 = vector.broadcast %cst_13 : f32 to vector<16x256xf32>
    %15 = arith.maximumf %13, %14 : vector<16x256xf32>
    %c0_14 = arith.constant 0 : index
    %c0_15 = arith.constant 0 : index
    %16 = vector.load %arg8[%c0_14, %c0_15] : memref<256x128xf32, #tpu.memory_space<vmem>>, vector<256x128xf32>
    %cst_16 = arith.constant dense<0.000000e+00> : vector<16x128xf32>
    %17 = tpu.matmul %15, %16, %cst_16 {dimension_numbers = #tpu.dot_dimension_numbers<[1], [0], [0], [1], [0, 0, 1, 1], [], []>} : vector<16x256xf32>, vector<256x128xf32>, vector<16x128xf32> -> vector<16x128xf32>
    %c0_17 = arith.constant 0 : index
    %c0_18 = arith.constant 0 : index
    %18 = vector.load %arg9[%c0_17, %c0_18] : memref<1x128xf32, #tpu.memory_space<vmem>>, vector<1x128xf32>
    %19 = vector.broadcast %18 : vector<1x128xf32> to vector<16x128xf32>
    %20 = arith.addf %17, %19 : vector<16x128xf32>
    %cst_19 = arith.constant 0.000000e+00 : f32
    %21 = vector.broadcast %cst_19 : f32 to vector<16x128xf32>
    %22 = arith.maximumf %20, %21 : vector<16x128xf32>
    %c0_20 = arith.constant 0 : index
    %c0_21 = arith.constant 0 : index
    %23 = vector.load %arg10[%c0_20, %c0_21] : memref<128x128xf32, #tpu.memory_space<vmem>>, vector<128x128xf32>
    %cst_22 = arith.constant dense<0.000000e+00> : vector<16x128xf32>
    %24 = tpu.matmul %22, %23, %cst_22 {dimension_numbers = #tpu.dot_dimension_numbers<[1], [0], [0], [1], [0, 0, 1, 1], [], []>} : vector<16x128xf32>, vector<128x128xf32>, vector<16x128xf32> -> vector<16x128xf32>
    %c0_23 = arith.constant 0 : index
    %c0_24 = arith.constant 0 : index
    %25 = vector.load %arg11[%c0_23, %c0_24] : memref<1x128xf32, #tpu.memory_space<vmem>>, vector<1x128xf32>
    %26 = vector.broadcast %25 : vector<1x128xf32> to vector<16x128xf32>
    %27 = arith.addf %24, %26 : vector<16x128xf32>
    %c0_25 = arith.constant 0 : index
    %c0_26 = arith.constant 0 : index
    %28 = vector.load %arg12[%c0_25, %c0_26] : memref<128x128xf32, #tpu.memory_space<vmem>>, vector<128x128xf32>
    %cst_27 = arith.constant dense<0.000000e+00> : vector<16x128xf32>
    %29 = tpu.matmul %22, %28, %cst_27 {dimension_numbers = #tpu.dot_dimension_numbers<[1], [0], [0], [1], [0, 0, 1, 1], [], []>} : vector<16x128xf32>, vector<128x128xf32>, vector<16x128xf32> -> vector<16x128xf32>
    %c0_28 = arith.constant 0 : index
    %c0_29 = arith.constant 0 : index
    %30 = vector.load %arg13[%c0_28, %c0_29] : memref<1x128xf32, #tpu.memory_space<vmem>>, vector<1x128xf32>
    %31 = vector.broadcast %30 : vector<1x128xf32> to vector<16x128xf32>
    %32 = arith.addf %29, %31 : vector<16x128xf32>
    %cst_30 = arith.constant 5.000000e-01 : f32
    %33 = vector.broadcast %cst_30 : f32 to vector<16x128xf32>
    %34 = arith.mulf %33, %32 : vector<16x128xf32>
    %35 = math.exp %34 : vector<16x128xf32>
    %36 = arith.mulf %1, %35 : vector<16x128xf32>
    %37 = arith.addf %27, %36 : vector<16x128xf32>
    %c0_31 = arith.constant 0 : index
    %c0_32 = arith.constant 0 : index
    %38 = vector.load %arg2[%c0_31, %c0_32] : memref<8x128xf32, #tpu.memory_space<vmem>>, vector<8x128xf32>
    %c0_33 = arith.constant 0 : index
    %c0_34 = arith.constant 0 : index
    %39 = vector.load %arg3[%c0_33, %c0_34] : memref<8x128xf32, #tpu.memory_space<vmem>>, vector<8x128xf32>
    %c0_35 = arith.constant 0 : index
    %c0_36 = arith.constant 0 : index
    %40 = vector.load %arg14[%c0_35, %c0_36] : memref<128x512xf32, #tpu.memory_space<vmem>>, vector<128x512xf32>
    %cst_37 = arith.constant dense<0.000000e+00> : vector<8x512xf32>
    %41 = tpu.matmul %38, %40, %cst_37 {dimension_numbers = #tpu.dot_dimension_numbers<[1], [0], [0], [1], [0, 0, 1, 1], [], []>} : vector<8x128xf32>, vector<128x512xf32>, vector<8x512xf32> -> vector<8x512xf32>
    %c0_38 = arith.constant 0 : index
    %c0_39 = arith.constant 0 : index
    %42 = vector.load %arg15[%c0_38, %c0_39] : memref<1x512xf32, #tpu.memory_space<vmem>>, vector<1x512xf32>
    %43 = vector.broadcast %42 : vector<1x512xf32> to vector<8x512xf32>
    %44 = arith.addf %41, %43 : vector<8x512xf32>
    %cst_40 = arith.constant 0.000000e+00 : f32
    %45 = vector.broadcast %cst_40 : f32 to vector<8x512xf32>
    %46 = arith.maximumf %44, %45 : vector<8x512xf32>
    %c0_41 = arith.constant 0 : index
    %c0_42 = arith.constant 0 : index
    %47 = vector.load %arg16[%c0_41, %c0_42] : memref<512x256xf32, #tpu.memory_space<vmem>>, vector<512x256xf32>
    %cst_43 = arith.constant dense<0.000000e+00> : vector<8x256xf32>
    %48 = tpu.matmul %46, %47, %cst_43 {dimension_numbers = #tpu.dot_dimension_numbers<[1], [0], [0], [1], [0, 0, 1, 1], [], []>} : vector<8x512xf32>, vector<512x256xf32>, vector<8x256xf32> -> vector<8x256xf32>
    %c0_44 = arith.constant 0 : index
    %c0_45 = arith.constant 0 : index
    %49 = vector.load %arg17[%c0_44, %c0_45] : memref<1x256xf32, #tpu.memory_space<vmem>>, vector<1x256xf32>
    %50 = vector.broadcast %49 : vector<1x256xf32> to vector<8x256xf32>
    %51 = arith.addf %48, %50 : vector<8x256xf32>
    %cst_46 = arith.constant 0.000000e+00 : f32
    %52 = vector.broadcast %cst_46 : f32 to vector<8x256xf32>
    %53 = arith.maximumf %51, %52 : vector<8x256xf32>
    %c0_47 = arith.constant 0 : index
    %c0_48 = arith.constant 0 : index
    %54 = vector.load %arg18[%c0_47, %c0_48] : memref<256x128xf32, #tpu.memory_space<vmem>>, vector<256x128xf32>
    %cst_49 = arith.constant dense<0.000000e+00> : vector<8x128xf32>
    %55 = tpu.matmul %53, %54, %cst_49 {dimension_numbers = #tpu.dot_dimension_numbers<[1], [0], [0], [1], [0, 0, 1, 1], [], []>} : vector<8x256xf32>, vector<256x128xf32>, vector<8x128xf32> -> vector<8x128xf32>
    %c0_50 = arith.constant 0 : index
    %c0_51 = arith.constant 0 : index
    %56 = vector.load %arg19[%c0_50, %c0_51] : memref<1x128xf32, #tpu.memory_space<vmem>>, vector<1x128xf32>
    %57 = vector.broadcast %56 : vector<1x128xf32> to vector<8x128xf32>
    %58 = arith.addf %55, %57 : vector<8x128xf32>
    %cst_52 = arith.constant 0.000000e+00 : f32
    %59 = vector.broadcast %cst_52 : f32 to vector<8x128xf32>
    %60 = arith.maximumf %58, %59 : vector<8x128xf32>
    %c0_53 = arith.constant 0 : index
    %c0_54 = arith.constant 0 : index
    %61 = vector.load %arg20[%c0_53, %c0_54] : memref<128x128xf32, #tpu.memory_space<vmem>>, vector<128x128xf32>
    %cst_55 = arith.constant dense<0.000000e+00> : vector<8x128xf32>
    %62 = tpu.matmul %60, %61, %cst_55 {dimension_numbers = #tpu.dot_dimension_numbers<[1], [0], [0], [1], [0, 0, 1, 1], [], []>} : vector<8x128xf32>, vector<128x128xf32>, vector<8x128xf32> -> vector<8x128xf32>
    %c0_56 = arith.constant 0 : index
    %c0_57 = arith.constant 0 : index
    %63 = vector.load %arg21[%c0_56, %c0_57] : memref<1x128xf32, #tpu.memory_space<vmem>>, vector<1x128xf32>
    %64 = vector.broadcast %63 : vector<1x128xf32> to vector<8x128xf32>
    %65 = arith.addf %62, %64 : vector<8x128xf32>
    %c0_58 = arith.constant 0 : index
    %c0_59 = arith.constant 0 : index
    %66 = vector.load %arg22[%c0_58, %c0_59] : memref<128x128xf32, #tpu.memory_space<vmem>>, vector<128x128xf32>
    %cst_60 = arith.constant dense<0.000000e+00> : vector<8x128xf32>
    %67 = tpu.matmul %60, %66, %cst_60 {dimension_numbers = #tpu.dot_dimension_numbers<[1], [0], [0], [1], [0, 0, 1, 1], [], []>} : vector<8x128xf32>, vector<128x128xf32>, vector<8x128xf32> -> vector<8x128xf32>
    %c0_61 = arith.constant 0 : index
    %c0_62 = arith.constant 0 : index
    %68 = vector.load %arg23[%c0_61, %c0_62] : memref<1x128xf32, #tpu.memory_space<vmem>>, vector<1x128xf32>
    %69 = vector.broadcast %68 : vector<1x128xf32> to vector<8x128xf32>
    %70 = arith.addf %67, %69 : vector<8x128xf32>
    %cst_63 = arith.constant 5.000000e-01 : f32
    %71 = vector.broadcast %cst_63 : f32 to vector<8x128xf32>
    %72 = arith.mulf %71, %70 : vector<8x128xf32>
    %73 = math.exp %72 : vector<8x128xf32>
    %74 = arith.mulf %39, %73 : vector<8x128xf32>
    %75 = arith.addf %65, %74 : vector<8x128xf32>
    %cst_64 = arith.constant dense<0.000000e+00> : vector<16x8xf32>
    %76 = tpu.matmul %37, %75, %cst_64 {dimension_numbers = #tpu.dot_dimension_numbers<[1], [1], [0], [0], [0, 0, 1, 0], [], []>} : vector<16x128xf32>, vector<8x128xf32>, vector<16x8xf32> -> vector<16x8xf32>
    %77 = tpu.iota {dimensions = array<i32: 0>} : vector<16x8xi32>
    %78 = tpu.iota {dimensions = array<i32: 1>} : vector<16x8xi32>
    %c16_i32 = arith.constant 16 : i32
    %79 = vector.broadcast %c16_i32 : i32 to vector<16x8xi32>
    %80 = arith.cmpi slt, %77, %79 : vector<16x8xi32>
    %c8_i32 = arith.constant 8 : i32
    %81 = vector.broadcast %c8_i32 : i32 to vector<16x8xi32>
    %82 = arith.cmpi slt, %78, %81 : vector<16x8xi32>
    %83 = arith.andi %80, %82 : vector<16x8xi1>
    %cst_65 = arith.constant 0xFF800000 : f32
    %84 = vector.broadcast %cst_65 : f32 to vector<16x8xf32>
    %85 = arith.select %83, %76, %84 : vector<16x8xi1>, vector<16x8xf32>
    %cst_66 = arith.constant dense<0xFF800000> : vector<16xf32>
    %86 = vector.multi_reduction <maximumf>, %85, %cst_66 [1] : vector<16x8xf32> to vector<16xf32>
    %87 = vector.shape_cast %86 : vector<16xf32> to vector<16x1xf32>
    %cst_67 = arith.constant dense<0xFF800000> : vector<1xf32>
    %88 = vector.multi_reduction <maximumf>, %87, %cst_67 [0] : vector<16x1xf32> to vector<1xf32>
    %89 = vector.shape_cast %88 : vector<1xf32> to vector<1x1xf32>
    %cst_68 = arith.constant 0x7F800000 : f32
    %90 = vector.broadcast %cst_68 : f32 to vector<16x8xf32>
    %91 = arith.select %83, %76, %90 : vector<16x8xi1>, vector<16x8xf32>
    %cst_69 = arith.constant dense<0x7F800000> : vector<16xf32>
    %92 = vector.multi_reduction <minimumf>, %91, %cst_69 [1] : vector<16x8xf32> to vector<16xf32>
    %93 = vector.shape_cast %92 : vector<16xf32> to vector<16x1xf32>
    %cst_70 = arith.constant dense<0x7F800000> : vector<1xf32>
    %94 = vector.multi_reduction <minimumf>, %93, %cst_70 [0] : vector<16x1xf32> to vector<1xf32>
    %95 = vector.shape_cast %94 : vector<1xf32> to vector<1x1xf32>
    %96 = vector.broadcast %95 : vector<1x1xf32> to vector<16x8xf32>
    %97 = arith.subf %76, %96 : vector<16x8xf32>
    %98 = arith.subf %89, %95 : vector<1x1xf32>
    %99 = vector.broadcast %98 : vector<1x1xf32> to vector<16x8xf32>
    %100 = arith.divf %97, %99 : vector<16x8xf32>
    %c0_71 = arith.constant 0 : index
    %c0_72 = arith.constant 0 : index
    %101 = vector.load %arg24[%c0_71, %c0_72] : memref<16x8xf32, #tpu.memory_space<vmem>>, vector<16x8xf32>
    tpu.vector_store %arg24[%c0_71, %c0_72], %100 {strides = array<i32>} : memref<16x8xf32, #tpu.memory_space<vmem>>, vector<16x8xf32>,
    return
  }
}

</mosaic_0001>

<llo_original>
// kernel: tpu_custom_call.1
$region0: #{tpu_custom_call.1}
  #allocation0 [shape = 'u32[]', space=smem, size = 0x4, offset = 0x4, fixed_abs, tag = 'smem constant byte address 0x4 - core index']
  #allocation1 [shape = 'u32[72,128]{1,0:T(1,128)}', space=vmem, size = 0x9000, scoped, tag = 'internal scratch']
  %s0 = inlined_call_operand.hbm [shape: f32[16,256], index: 0, kind: input, shape index: {}]
  %s1 = inlined_call_operand.hbm [shape: f32[16,128], index: 1, kind: input, shape index: {}]
  %s2 = inlined_call_operand.hbm [shape: f32[8,128], index: 2, kind: input, shape index: {}]
  %s3 = inlined_call_operand.hbm [shape: f32[8,128], index: 3, kind: input, shape index: {}]
  %s4 = inlined_call_operand.hbm [shape: f32[256,512], index: 4, kind: input, shape index: {}]
  %s5 = inlined_call_operand.vmem [shape: f32[1,512], index: 5, kind: input, shape index: {}]
  %s6 = inlined_call_operand.hbm [shape: f32[512,256], index: 6, kind: input, shape index: {}]
  %s7 = inlined_call_operand.hbm [shape: f32[1,256], index: 7, kind: input, shape index: {}]
  %s8 = inlined_call_operand.hbm [shape: f32[256,128], index: 8, kind: input, shape index: {}]
  %s9 = inlined_call_operand.hbm [shape: f32[1,128], index: 9, kind: input, shape index: {}]
  %s10 = inlined_call_operand.hbm [shape: f32[128,128], index: 10, kind: input, shape index: {}]
  %s11 = inlined_call_operand.hbm [shape: f32[1,128], index: 11, kind: input, shape index: {}]
  %s12 = inlined_call_operand.hbm [shape: f32[128,128], index: 12, kind: input, shape index: {}]
  %s13 = inlined_call_operand.vmem [shape: f32[1,128], index: 13, kind: input, shape index: {}]
  %s14 = inlined_call_operand.hbm [shape: f32[128,512], index: 14, kind: input, shape index: {}]
  %s15 = inlined_call_operand.vmem [shape: f32[1,512], index: 15, kind: input, shape index: {}]
  %s16 = inlined_call_operand.hbm [shape: f32[512,256], index: 16, kind: input, shape index: {}]
  %s17 = inlined_call_operand.vmem [shape: f32[1,256], index: 17, kind: input, shape index: {}]
  %s18 = inlined_call_operand.hbm [shape: f32[256,128], index: 18, kind: input, shape index: {}]
  %s19 = inlined_call_operand.vmem [shape: f32[1,128], index: 19, kind: input, shape index: {}]
  %s20 = inlined_call_operand.hbm [shape: f32[128,128], index: 20, kind: input, shape index: {}]
  %s21 = inlined_call_operand.vmem [shape: f32[1,128], index: 21, kind: input, shape index: {}]
  %s22 = inlined_call_operand.hbm [shape: f32[128,128], index: 22, kind: input, shape index: {}]
  %s23 = inlined_call_operand.vmem [shape: f32[1,128], index: 23, kind: input, shape index: {}]
  %s24 = inlined_call_operand.vmem [shape: f32[16,8], index: 24, kind: output, shape index: {}]
  %s25 = sld [smem:[#allocation0]]
  $region174: #{tpu_custom_call.1} parent=0
    _
  %s27 = ssub.s32 1, %s25
  %s28 = scalar_select 0, %s27, %s25
  $region1: #{tpu_custom_call.1} parent=0
    #allocation2 [shape = 'u8[16384]{0}', space=vmem, size = 0x4000, scoped, tag = 'input window, operand 0, single buffered']
    #allocation3 [shape = 's32[1]{0}', space=sflag, size = 0x4, scoped, tag = 'scoped memory for tpu_custom_call.1']
    #allocation4 [shape = 'u8[8192]{0}', space=vmem, size = 0x2000, scoped, tag = 'input window, operand 1, single buffered']
    #allocation5 [shape = 's32[1]{0}', space=sflag, size = 0x4, scoped, tag = 'scoped memory for tpu_custom_call.1']
    #allocation6 [shape = 'u8[4096]{0}', space=vmem, size = 0x1000, scoped, tag = 'input window, operand 2, single buffered']
    #allocation7 [shape = 'u8[4096]{0}', space=vmem, size = 0x1000, scoped, tag = 'input window, operand 3, single buffered']
    #allocation8 [shape = 's32[1]{0}', space=sflag, size = 0x4, scoped, tag = 'scoped memory for tpu_custom_call.1']
    #allocation9 [shape = 'u8[524288]{0}', space=vmem, size = 0x80000, scoped, tag = 'input window, operand 4, single buffered']
    #allocation10 [shape = 'u8[524288]{0}', space=vmem, size = 0x80000, scoped, tag = 'input window, operand 6, single buffered']
    #allocation11 [shape = 's32[1]{0}', space=sflag, size = 0x4, scoped, tag = 'scoped memory for tpu_custom_call.1']
    #allocation12 [shape = 'u8[1024]{0}', space=vmem, size = 0x400, scoped, tag = 'input window, operand 7, single buffered']
    #allocation13 [shape = 'u8[131072]{0}', space=vmem, size = 0x20000, scoped, tag = 'input window, operand 8, single buffered']
    #allocation14 [shape = 's32[1]{0}', space=sflag, size = 0x4, scoped, tag = 'scoped memory for tpu_custom_call.1']
    #allocation15 [shape = 'u8[512]{0}', space=vmem, size = 0x400, scoped, tag = 'input window, operand 9, single buffered']
    #allocation16 [shape = 'u8[65536]{0}', space=vmem, size = 0x10000, scoped, tag = 'input window, operand 10, single buffered']
    #allocation17 [shape = 's32[1]{0}', space=sflag, size = 0x4, scoped, tag = 'scoped memory for tpu_custom_call.1']
    #allocation18 [shape = 'u8[512]{0}', space=vmem, size = 0x400, scoped, tag = 'input window, operand 11, single buffered']
    #allocation19 [shape = 'u8[65536]{0}', space=vmem, size = 0x10000, scoped, tag = 'input window, operand 12, single buffered']
    #allocation20 [shape = 's32[1]{0}', space=sflag, size = 0x4, scoped, tag = 'scoped memory for tpu_custom_call.1']
    #allocation21 [shape = 'u8[262144]{0}', space=vmem, size = 0x40000, scoped, tag = 'input window, operand 14, single buffered']
    #allocation22 [shape = 'u8[524288]{0}', space=vmem, size = 0x80000, scoped, tag = 'input window, operand 16, single buffered']
    #allocation23 [shape = 's32[1]{0}', space=sflag, size = 0x4, scoped, tag = 'scoped memory for tpu_custom_call.1']
    #allocation24 [shape = 'u8[131072]{0}', space=vmem, size = 0x20000, scoped, tag = 'input window, operand 18, single buffered']
    #allocation25 [shape = 'u8[65536]{0}', space=vmem, size = 0x10000, scoped, tag = 'input window, operand 20, single buffered']
    #allocation26 [shape = 's32[1]{0}', space=sflag, size = 0x4, scoped, tag = 'scoped memory for tpu_custom_call.1']
    #allocation27 [shape = 'u8[65536]{0}', space=vmem, size = 0x10000, scoped, tag = 'input window, operand 22, single buffered']
    %29 = vsyncpa [#allocation3], 0
    %30 = vsyncpa [#allocation5], 0
    %31 = vsyncpa [#allocation8], 0
    %32 = vsyncpa [#allocation11], 0
    %33 = vsyncpa [#allocation14], 0
    %34 = vsyncpa [#allocation17], 0
    %35 = vsyncpa [#allocation20], 0
    %36 = vsyncpa [#allocation23], 0
    %37 = vsyncpa [#allocation26], 0
    // Predicated region
    $region2: #{tpu_custom_call.1} parent=1 // pred_check
      _
    $region3: #{tpu_custom_call.1} parent=1 // pred_check_branch
      %39 = sbr.rel (0) target = $region5
    $region4: #{tpu_custom_call.1} parent=1 // pred_region
      %41 = vsyncadd [#allocation3], 0
      %s42 = sshll.u32 %s0, 4
      %s43 = int_to_ptr.hbm [resolvable:$true] %s42
      %s44 = sshll.u32 [#allocation2], 4
      %s45 = int_to_ptr.vmem [resolvable:$true] %s44
      %50 = dma.hbm_to_vmem [thread:$0]  %s43, 512, %s45, [#allocation3], 256, 256, 16
    $region5: #{tpu_custom_call.1} parent=1 // pred_fallthru
      _
    // Predicated region
    $region6: #{tpu_custom_call.1} parent=1 // pred_check
      _
    $region7: #{tpu_custom_call.1} parent=1 // pred_check_branch
      %52 = sbr.rel (0) target = $region9
    $region8: #{tpu_custom_call.1} parent=1 // pred_region
      %54 = vsyncadd [#allocation5], 0
      %s55 = sshll.u32 %s1, 4
      %s56 = int_to_ptr.hbm [resolvable:$true] %s55
      %s57 = sshll.u32 [#allocation4], 4
      %s58 = int_to_ptr.vmem [resolvable:$true] %s57
      %63 = dma.hbm_to_vmem [thread:$0]  %s56, 256, %s58, [#allocation5], 128, 128, 8
    $region9: #{tpu_custom_call.1} parent=1 // pred_fallthru
      _
    // Predicated region
    $region10: #{tpu_custom_call.1} parent=1 // pred_check
      _
    $region11: #{tpu_custom_call.1} parent=1 // pred_check_branch
      %65 = sbr.rel (0) target = $region13
    $region12: #{tpu_custom_call.1} parent=1 // pred_region
      %67 = vsyncadd [#allocation5], 0
      %s69 = sshll.u32 %s2, 4
      %s70 = int_to_ptr.hbm [resolvable:$true] %s69
      %s71 = sshll.u32 [#allocation6], 4
      %s72 = int_to_ptr.vmem [resolvable:$true] %s71
      %74 = dma.hbm_to_vmem [thread:$0]  %s70, 128, %s72, [#allocation5]
    $region13: #{tpu_custom_call.1} parent=1 // pred_fallthru
      _
    // Predicated region
    $region14: #{tpu_custom_call.1} parent=1 // pred_check
      _
    $region15: #{tpu_custom_call.1} parent=1 // pred_check_branch
      %76 = sbr.rel (0) target = $region17
    $region16: #{tpu_custom_call.1} parent=1 // pred_region
      %78 = vsyncadd [#allocation8], 0
      %s80 = sshll.u32 %s3, 4
      %s81 = int_to_ptr.hbm [resolvable:$true] %s80
      %s82 = sshll.u32 [#allocation7], 4
      %s83 = int_to_ptr.vmem [resolvable:$true] %s82
      %85 = dma.hbm_to_vmem [thread:$0]  %s81, 128, %s83, [#allocation8]
    $region17: #{tpu_custom_call.1} parent=1 // pred_fallthru
      _
    // Predicated region
    $region18: #{tpu_custom_call.1} parent=1 // pred_check
      _
    $region19: #{tpu_custom_call.1} parent=1 // pred_check_branch
      %87 = sbr.rel (0) target = $region21
    $region20: #{tpu_custom_call.1} parent=1 // pred_region
      %89 = vsyncadd [#allocation8], 0
      %s90 = sshll.u32 %s4, 4
      %s91 = int_to_ptr.hbm [resolvable:$true] %s90
      %s92 = sshll.u32 [#allocation9], 4
      %s93 = int_to_ptr.vmem [resolvable:$true] %s92
      %98 = dma.hbm_to_vmem [thread:$0]  %s91, 16384, %s93, [#allocation8], 512, 512, 32
    $region21: #{tpu_custom_call.1} parent=1 // pred_fallthru
      _
    // Predicated region
    $region22: #{tpu_custom_call.1} parent=1 // pred_check
      _
    $region23: #{tpu_custom_call.1} parent=1 // pred_check_branch
      %100 = sbr.rel (0) target = $region25
    $region24: #{tpu_custom_call.1} parent=1 // pred_region
      _
    $region25: #{tpu_custom_call.1} parent=1 // pred_fallthru
      _
    // Predicated region
    $region26: #{tpu_custom_call.1} parent=1 // pred_check
      _
    $region27: #{tpu_custom_call.1} parent=1 // pred_check_branch
      %102 = sbr.rel (0) target = $region29
    $region28: #{tpu_custom_call.1} parent=1 // pred_region
      %104 = vsyncadd [#allocation11], 0
      %s105 = sshll.u32 %s6, 4
      %s106 = int_to_ptr.hbm [resolvable:$true] %s105
      %s107 = sshll.u32 [#allocation10], 4
      %s108 = int_to_ptr.vmem [resolvable:$true] %s107
      %113 = dma.hbm_to_vmem [thread:$0]  %s106, 16384, %s108, [#allocation11], 256, 256, 16
    $region29: #{tpu_custom_call.1} parent=1 // pred_fallthru
      _
    // Predicated region
    $region30: #{tpu_custom_call.1} parent=1 // pred_check
      _
    $region31: #{tpu_custom_call.1} parent=1 // pred_check_branch
      %115 = sbr.rel (0) target = $region33
    $region32: #{tpu_custom_call.1} parent=1 // pred_region
      %117 = vsyncadd [#allocation11], 0
      %s119 = sshll.u32 %s7, 4
      %s120 = int_to_ptr.hbm [resolvable:$true] %s119
      %s121 = sshll.u32 [#allocation12], 4
      %s122 = int_to_ptr.vmem [resolvable:$true] %s121
      %124 = dma.hbm_to_vmem [thread:$0]  %s120, 32, %s122, [#allocation11]
    $region33: #{tpu_custom_call.1} parent=1 // pred_fallthru
      _
    // Predicated region
    $region34: #{tpu_custom_call.1} parent=1 // pred_check
      _
    $region35: #{tpu_custom_call.1} parent=1 // pred_check_branch
      %126 = sbr.rel (0) target = $region37
    $region36: #{tpu_custom_call.1} parent=1 // pred_region
      %128 = vsyncadd [#allocation14], 0
      %s129 = sshll.u32 %s8, 4
      %s130 = int_to_ptr.hbm [resolvable:$true] %s129
      %s131 = sshll.u32 [#allocation13], 4
      %s132 = int_to_ptr.vmem [resolvable:$true] %s131
      %137 = dma.hbm_to_vmem [thread:$0]  %s130, 4096, %s132, [#allocation14], 128, 128, 8
    $region37: #{tpu_custom_call.1} parent=1 // pred_fallthru
      _
    // Predicated region
    $region38: #{tpu_custom_call.1} parent=1 // pred_check
      _
    $region39: #{tpu_custom_call.1} parent=1 // pred_check_branch
      %139 = sbr.rel (0) target = $region41
    $region40: #{tpu_custom_call.1} parent=1 // pred_region
      %141 = vsyncadd [#allocation14], 0
      %s143 = sshll.u32 %s9, 4
      %s144 = int_to_ptr.hbm [resolvable:$true] %s143
      %s145 = sshll.u32 [#allocation15], 4
      %s146 = int_to_ptr.vmem [resolvable:$true] %s145
      %148 = dma.hbm_to_vmem [thread:$0]  %s144, 16, %s146, [#allocation14]
    $region41: #{tpu_custom_call.1} parent=1 // pred_fallthru
      _
    // Predicated region
    $region42: #{tpu_custom_call.1} parent=1 // pred_check
      _
    $region43: #{tpu_custom_call.1} parent=1 // pred_check_branch
      %150 = sbr.rel (0) target = $region45
    $region44: #{tpu_custom_call.1} parent=1 // pred_region
      %152 = vsyncadd [#allocation17], 0
      %s153 = sshll.u32 %s10, 4
      %s154 = int_to_ptr.hbm [resolvable:$true] %s153
      %s155 = sshll.u32 [#allocation16], 4
      %s156 = int_to_ptr.vmem [resolvable:$true] %s155
      %161 = dma.hbm_to_vmem [thread:$0]  %s154, 2048, %s156, [#allocation17], 128, 128, 8
    $region45: #{tpu_custom_call.1} parent=1 // pred_fallthru
      _
    // Predicated region
    $region46: #{tpu_custom_call.1} parent=1 // pred_check
      _
    $region47: #{tpu_custom_call.1} parent=1 // pred_check_branch
      %163 = sbr.rel (0) target = $region49
    $region48: #{tpu_custom_call.1} parent=1 // pred_region
      %165 = vsyncadd [#allocation17], 0
      %s167 = sshll.u32 %s11, 4
      %s168 = int_to_ptr.hbm [resolvable:$true] %s167
      %s169 = sshll.u32 [#allocation18], 4
      %s170 = int_to_ptr.vmem [resolvable:$true] %s169
      %172 = dma.hbm_to_vmem [thread:$0]  %s168, 16, %s170, [#allocation17]
    $region49: #{tpu_custom_call.1} parent=1 // pred_fallthru
      _
    // Predicated region
    $region50: #{tpu_custom_call.1} parent=1 // pred_check
      _
    $region51: #{tpu_custom_call.1} parent=1 // pred_check_branch
      %174 = sbr.rel (0) target = $region53
    $region52: #{tpu_custom_call.1} parent=1 // pred_region
      %176 = vsyncadd [#allocation20], 0
      %s177 = sshll.u32 %s12, 4
      %s178 = int_to_ptr.hbm [resolvable:$true] %s177
      %s179 = sshll.u32 [#allocation19], 4
      %s180 = int_to_ptr.vmem [resolvable:$true] %s179
      %185 = dma.hbm_to_vmem [thread:$0]  %s178, 2048, %s180, [#allocation20], 128, 128, 8
    $region53: #{tpu_custom_call.1} parent=1 // pred_fallthru
      _
    // Predicated region
    $region54: #{tpu_custom_call.1} parent=1 // pred_check
      _
    $region55: #{tpu_custom_call.1} parent=1 // pred_check_branch
      %187 = sbr.rel (0) target = $region57
    $region56: #{tpu_custom_call.1} parent=1 // pred_region
      _
    $region57: #{tpu_custom_call.1} parent=1 // pred_fallthru
      _
    // Predicated region
    $region58: #{tpu_custom_call.1} parent=1 // pred_check
      _
    $region59: #{tpu_custom_call.1} parent=1 // pred_check_branch
      %189 = sbr.rel (0) target = $region61
    $region60: #{tpu_custom_call.1} parent=1 // pred_region
      %191 = vsyncadd [#allocation20], 0
      %s192 = sshll.u32 %s14, 4
      %s193 = int_to_ptr.hbm [resolvable:$true] %s192
      %s194 = sshll.u32 [#allocation21], 4
      %s195 = int_to_ptr.vmem [resolvable:$true] %s194
      %200 = dma.hbm_to_vmem [thread:$0]  %s193, 8192, %s195, [#allocation20], 512, 512, 32
    $region61: #{tpu_custom_call.1} parent=1 // pred_fallthru
      _
    // Predicated region
    $region62: #{tpu_custom_call.1} parent=1 // pred_check
      _
    $region63: #{tpu_custom_call.1} parent=1 // pred_check_branch
      %202 = sbr.rel (0) target = $region65
    $region64: #{tpu_custom_call.1} parent=1 // pred_region
      _
    $region65: #{tpu_custom_call.1} parent=1 // pred_fallthru
      _
    // Predicated region
    $region66: #{tpu_custom_call.1} parent=1 // pred_check
      _
    $region67: #{tpu_custom_call.1} parent=1 // pred_check_branch
      %204 = sbr.rel (0) target = $region69
    $region68: #{tpu_custom_call.1} parent=1 // pred_region
      %206 = vsyncadd [#allocation23], 0
      %s207 = sshll.u32 %s16, 4
      %s208 = int_to_ptr.hbm [resolvable:$true] %s207
      %s209 = sshll.u32 [#allocation22], 4
      %s210 = int_to_ptr.vmem [resolvable:$true] %s209
      %215 = dma.hbm_to_vmem [thread:$0]  %s208, 16384, %s210, [#allocation23], 256, 256, 16
    $region69: #{tpu_custom_call.1} parent=1 // pred_fallthru
      _
    // Predicated region
    $region70: #{tpu_custom_call.1} parent=1 // pred_check
      _
    $region71: #{tpu_custom_call.1} parent=1 // pred_check_branch
      %217 = sbr.rel (0) target = $region73
    $region72: #{tpu_custom_call.1} parent=1 // pred_region
      _
    $region73: #{tpu_custom_call.1} parent=1 // pred_fallthru
      _
    // Predicated region
    $region74: #{tpu_custom_call.1} parent=1 // pred_check
      _
    $region75: #{tpu_custom_call.1} parent=1 // pred_check_branch
      %219 = sbr.rel (0) target = $region77
    $region76: #{tpu_custom_call.1} parent=1 // pred_region
      %221 = vsyncadd [#allocation23], 0
      %s222 = sshll.u32 %s18, 4
      %s223 = int_to_ptr.hbm [resolvable:$true] %s222
      %s224 = sshll.u32 [#allocation24], 4
      %s225 = int_to_ptr.vmem [resolvable:$true] %s224
      %230 = dma.hbm_to_vmem [thread:$0]  %s223, 4096, %s225, [#allocation23], 128, 128, 8
    $region77: #{tpu_custom_call.1} parent=1 // pred_fallthru
      _
    // Predicated region
    $region78: #{tpu_custom_call.1} parent=1 // pred_check
      _
    $region79: #{tpu_custom_call.1} parent=1 // pred_check_branch
      %232 = sbr.rel (0) target = $region81
    $region80: #{tpu_custom_call.1} parent=1 // pred_region
      _
    $region81: #{tpu_custom_call.1} parent=1 // pred_fallthru
      _
    // Predicated region
    $region82: #{tpu_custom_call.1} parent=1 // pred_check
      _
    $region83: #{tpu_custom_call.1} parent=1 // pred_check_branch
      %234 = sbr.rel (0) target = $region85
    $region84: #{tpu_custom_call.1} parent=1 // pred_region
      %236 = vsyncadd [#allocation26], 0
      %s237 = sshll.u32 %s20, 4
      %s238 = int_to_ptr.hbm [resolvable:$true] %s237
      %s239 = sshll.u32 [#allocation25], 4
      %s240 = int_to_ptr.vmem [resolvable:$true] %s239
      %245 = dma.hbm_to_vmem [thread:$0]  %s238, 2048, %s240, [#allocation26], 128, 128, 8
    $region85: #{tpu_custom_call.1} parent=1 // pred_fallthru
      _
    // Predicated region
    $region86: #{tpu_custom_call.1} parent=1 // pred_check
      _
    $region87: #{tpu_custom_call.1} parent=1 // pred_check_branch
      %247 = sbr.rel (0) target = $region89
    $region88: #{tpu_custom_call.1} parent=1 // pred_region
      _
    $region89: #{tpu_custom_call.1} parent=1 // pred_fallthru
      _
    // Predicated region
    $region90: #{tpu_custom_call.1} parent=1 // pred_check
      _
    $region91: #{tpu_custom_call.1} parent=1 // pred_check_branch
      %249 = sbr.rel (0) target = $region93
    $region92: #{tpu_custom_call.1} parent=1 // pred_region
      %251 = vsyncadd [#allocation26], 0
      %s252 = sshll.u32 %s22, 4
      %s253 = int_to_ptr.hbm [resolvable:$true] %s252
      %s254 = sshll.u32 [#allocation27], 4
      %s255 = int_to_ptr.vmem [resolvable:$true] %s254
      %260 = dma.hbm_to_vmem [thread:$0]  %s253, 2048, %s255, [#allocation26], 128, 128, 8
    $region93: #{tpu_custom_call.1} parent=1 // pred_fallthru
      _
    // Predicated region
    $region94: #{tpu_custom_call.1} parent=1 // pred_check
      _
    $region95: #{tpu_custom_call.1} parent=1 // pred_check_branch
      %262 = sbr.rel (0) target = $region97
    $region96: #{tpu_custom_call.1} parent=1 // pred_region
      _
    $region97: #{tpu_custom_call.1} parent=1 // pred_fallthru
      _
    // Predicated region
    $region98: #{tpu_custom_call.1} parent=1 // pred_check
      _
    $region99: #{tpu_custom_call.1} parent=1 // pred_check_branch
      %264 = sbr.rel (0) target = $region101
    $region100: #{tpu_custom_call.1} parent=1 // pred_region
      %266 = dma.done [#allocation3], 512
    $region101: #{tpu_custom_call.1} parent=1 // pred_fallthru
      _
    // Predicated region
    $region102: #{tpu_custom_call.1} parent=1 // pred_check
      _
    $region103: #{tpu_custom_call.1} parent=1 // pred_check_branch
      %268 = sbr.rel (0) target = $region105
    $region104: #{tpu_custom_call.1} parent=1 // pred_region
      %270 = dma.done [#allocation5], 256
    $region105: #{tpu_custom_call.1} parent=1 // pred_fallthru
      _
    // Predicated region
    $region106: #{tpu_custom_call.1} parent=1 // pred_check
      _
    $region107: #{tpu_custom_call.1} parent=1 // pred_check_branch
      %272 = sbr.rel (0) target = $region109
    $region108: #{tpu_custom_call.1} parent=1 // pred_region
      %274 = dma.done [#allocation5], 128
    $region109: #{tpu_custom_call.1} parent=1 // pred_fallthru
      _
    // Predicated region
    $region110: #{tpu_custom_call.1} parent=1 // pred_check
      _
    $region111: #{tpu_custom_call.1} parent=1 // pred_check_branch
      %276 = sbr.rel (0) target = $region113
    $region112: #{tpu_custom_call.1} parent=1 // pred_region
      %278 = dma.done [#allocation8], 128
    $region113: #{tpu_custom_call.1} parent=1 // pred_fallthru
      _
    // Predicated region
    $region114: #{tpu_custom_call.1} parent=1 // pred_check
      _
    $region115: #{tpu_custom_call.1} parent=1 // pred_check_branch
      %280 = sbr.rel (0) target = $region117
    $region116: #{tpu_custom_call.1} parent=1 // pred_region
      %282 = dma.done [#allocation8], 16384
    $region117: #{tpu_custom_call.1} parent=1 // pred_fallthru
      _
    // Predicated region
    $region118: #{tpu_custom_call.1} parent=1 // pred_check
      _
    $region119: #{tpu_custom_call.1} parent=1 // pred_check_branch
      %284 = sbr.rel (0) target = $region121
    $region120: #{tpu_custom_call.1} parent=1 // pred_region
      %286 = dma.done [#allocation11], 16384
    $region121: #{tpu_custom_call.1} parent=1 // pred_fallthru
      _
    // Predicated region
    $region122: #{tpu_custom_call.1} parent=1 // pred_check
      _
    $region123: #{tpu_custom_call.1} parent=1 // pred_check_branch
      %288 = sbr.rel (0) target = $region125
    $region124: #{tpu_custom_call.1} parent=1 // pred_region
      %290 = dma.done [#allocation11], 32
    $region125: #{tpu_custom_call.1} parent=1 // pred_fallthru
      _
    // Predicated region
    $region126: #{tpu_custom_call.1} parent=1 // pred_check
      _
    $region127: #{tpu_custom_call.1} parent=1 // pred_check_branch
      %292 = sbr.rel (0) target = $region129
    $region128: #{tpu_custom_call.1} parent=1 // pred_region
      %294 = dma.done [#allocation14], 4096
    $region129: #{tpu_custom_call.1} parent=1 // pred_fallthru
      _
    // Predicated region
    $region130: #{tpu_custom_call.1} parent=1 // pred_check
      _
    $region131: #{tpu_custom_call.1} parent=1 // pred_check_branch
      %296 = sbr.rel (0) target = $region133
    $region132: #{tpu_custom_call.1} parent=1 // pred_region
      %298 = dma.done [#allocation14], 16
    $region133: #{tpu_custom_call.1} parent=1 // pred_fallthru
      _
    // Predicated region
    $region134: #{tpu_custom_call.1} parent=1 // pred_check
      _
    $region135: #{tpu_custom_call.1} parent=1 // pred_check_branch
      %300 = sbr.rel (0) target = $region137
    $region136: #{tpu_custom_call.1} parent=1 // pred_region
      %302 = dma.done [#allocation17], 2048
    $region137: #{tpu_custom_call.1} parent=1 // pred_fallthru
      _
    // Predicated region
    $region138: #{tpu_custom_call.1} parent=1 // pred_check
      _
    $region139: #{tpu_custom_call.1} parent=1 // pred_check_branch
      %304 = sbr.rel (0) target = $region141
    $region140: #{tpu_custom_call.1} parent=1 // pred_region
      %306 = dma.done [#allocation17], 16
    $region141: #{tpu_custom_call.1} parent=1 // pred_fallthru
      _
    // Predicated region
    $region142: #{tpu_custom_call.1} parent=1 // pred_check
      _
    $region143: #{tpu_custom_call.1} parent=1 // pred_check_branch
      %308 = sbr.rel (0) target = $region145
    $region144: #{tpu_custom_call.1} parent=1 // pred_region
      %310 = dma.done [#allocation20], 2048
    $region145: #{tpu_custom_call.1} parent=1 // pred_fallthru
      _
    // Predicated region
    $region146: #{tpu_custom_call.1} parent=1 // pred_check
      _
    $region147: #{tpu_custom_call.1} parent=1 // pred_check_branch
      %312 = sbr.rel (0) target = $region149
    $region148: #{tpu_custom_call.1} parent=1 // pred_region
      %314 = dma.done [#allocation20], 8192
    $region149: #{tpu_custom_call.1} parent=1 // pred_fallthru
      _
    // Predicated region
    $region150: #{tpu_custom_call.1} parent=1 // pred_check
      _
    $region151: #{tpu_custom_call.1} parent=1 // pred_check_branch
      %316 = sbr.rel (0) target = $region153
    $region152: #{tpu_custom_call.1} parent=1 // pred_region
      %318 = dma.done [#allocation23], 16384
    $region153: #{tpu_custom_call.1} parent=1 // pred_fallthru
      _
    // Predicated region
    $region154: #{tpu_custom_call.1} parent=1 // pred_check
      _
    $region155: #{tpu_custom_call.1} parent=1 // pred_check_branch
      %320 = sbr.rel (0) target = $region157
    $region156: #{tpu_custom_call.1} parent=1 // pred_region
      %322 = dma.done [#allocation23], 4096
    $region157: #{tpu_custom_call.1} parent=1 // pred_fallthru
      _
    // Predicated region
    $region158: #{tpu_custom_call.1} parent=1 // pred_check
      _
    $region159: #{tpu_custom_call.1} parent=1 // pred_check_branch
      %324 = sbr.rel (0) target = $region161
    $region160: #{tpu_custom_call.1} parent=1 // pred_region
      %326 = dma.done [#allocation26], 2048
    $region161: #{tpu_custom_call.1} parent=1 // pred_fallthru
      _
    // Predicated region
    $region162: #{tpu_custom_call.1} parent=1 // pred_check
      _
    $region163: #{tpu_custom_call.1} parent=1 // pred_check_branch
      %328 = sbr.rel (0) target = $region165
    $region164: #{tpu_custom_call.1} parent=1 // pred_region
      %330 = dma.done [#allocation26], 2048
    $region165: #{tpu_custom_call.1} parent=1 // pred_fallthru
      _
    %v331 = vld [vmem:[#allocation2] sm:$0xff]
    %v332 = vld [vmem:[#allocation2 + $0x8] sm:$0xff]
    %v333 = vld [vmem:[#allocation2 + $0x10] sm:$0xff]
    %v334 = vld [vmem:[#allocation2 + $0x18] sm:$0xff]
    %v335 = vld [vmem:[#allocation4] sm:$0xff]
    %v336 = vld [vmem:[#allocation4 + $0x8] sm:$0xff]
    %v337 = vld [vmem:[#allocation9] sm:$0xff]
    %v338 = vld [vmem:[#allocation9 + $0x8] sm:$0xff]
    %v339 = vld [vmem:[#allocation9 + $0x10] sm:$0xff]
    %v340 = vld [vmem:[#allocation9 + $0x18] sm:$0xff]
    %v341 = vld [vmem:[#allocation9 + $0x20] sm:$0xff]
    %v342 = vld [vmem:[#allocation9 + $0x28] sm:$0xff]
    %v343 = vld [vmem:[#allocation9 + $0x30] sm:$0xff]
    %v344 = vld [vmem:[#allocation9 + $0x38] sm:$0xff]
    %v345 = vld [vmem:[#allocation9 + $0x40] sm:$0xff]
    %v346 = vld [vmem:[#allocation9 + $0x48] sm:$0xff]
    %v347 = vld [vmem:[#allocation9 + $0x50] sm:$0xff]
    %v348 = vld [vmem:[#allocation9 + $0x58] sm:$0xff]
    %v349 = vld [vmem:[#allocation9 + $0x60] sm:$0xff]
    %v350 = vld [vmem:[#allocation9 + $0x68] sm:$0xff]
    %v351 = vld [vmem:[#allocation9 + $0x70] sm:$0xff]
    %v352 = vld [vmem:[#allocation9 + $0x78] sm:$0xff]
    %v353 = vld [vmem:[#allocation9 + $0x80] sm:$0xff]
    %v354 = vld [vmem:[#allocation9 + $0x88] sm:$0xff]
    %v355 = vld [vmem:[#allocation9 + $0x90] sm:$0xff]
    %v356 = vld [vmem:[#allocation9 + $0x98] sm:$0xff]
    %v357 = vld [vmem:[#allocation9 + $0xa0] sm:$0xff]
    %v358 = vld [vmem:[#allocation9 + $0xa8] sm:$0xff]
    %v359 = vld [vmem:[#allocation9 + $0xb0] sm:$0xff]
    %v360 = vld [vmem:[#allocation9 + $0xb8] sm:$0xff]
    %v361 = vld [vmem:[#allocation9 + $0xc0] sm:$0xff]
    %v362 = vld [vmem:[#allocation9 + $0xc8] sm:$0xff]
    %v363 = vld [vmem:[#allocation9 + $0xd0] sm:$0xff]
    %v364 = vld [vmem:[#allocation9 + $0xd8] sm:$0xff]
    %v365 = vld [vmem:[#allocation9 + $0xe0] sm:$0xff]
    %v366 = vld [vmem:[#allocation9 + $0xe8] sm:$0xff]
    %v367 = vld [vmem:[#allocation9 + $0xf0] sm:$0xff]
    %v368 = vld [vmem:[#allocation9 + $0xf8] sm:$0xff]
    %v369 = vld [vmem:[#allocation9 + $0x100] sm:$0xff]
    %v370 = vld [vmem:[#allocation9 + $0x108] sm:$0xff]
    %v371 = vld [vmem:[#allocation9 + $0x110] sm:$0xff]
    %v372 = vld [vmem:[#allocation9 + $0x118] sm:$0xff]
    %v373 = vld [vmem:[#allocation9 + $0x120] sm:$0xff]
    %v374 = vld [vmem:[#allocation9 + $0x128] sm:$0xff]
    %v375 = vld [vmem:[#allocation9 + $0x130] sm:$0xff]
    %v376 = vld [vmem:[#allocation9 + $0x138] sm:$0xff]
    %v377 = vld [vmem:[#allocation9 + $0x140] sm:$0xff]
    %v378 = vld [vmem:[#allocation9 + $0x148] sm:$0xff]
    %v379 = vld [vmem:[#allocation9 + $0x150] sm:$0xff]
    %v380 = vld [vmem:[#allocation9 + $0x158] sm:$0xff]
    %v381 = vld [vmem:[#allocation9 + $0x160] sm:$0xff]
    %v382 = vld [vmem:[#allocation9 + $0x168] sm:$0xff]
    %v383 = vld [vmem:[#allocation9 + $0x170] sm:$0xff]
    %v384 = vld [vmem:[#allocation9 + $0x178] sm:$0xff]
    %v385 = vld [vmem:[#allocation9 + $0x180] sm:$0xff]
    %v386 = vld [vmem:[#allocation9 + $0x188] sm:$0xff]
    %v387 = vld [vmem:[#allocation9 + $0x190] sm:$0xff]
    %v388 = vld [vmem:[#allocation9 + $0x198] sm:$0xff]
    %v389 = vld [vmem:[#allocation9 + $0x1a0] sm:$0xff]
    %v390 = vld [vmem:[#allocation9 + $0x1a8] sm:$0xff]
    %v391 = vld [vmem:[#allocation9 + $0x1b0] sm:$0xff]
    %v392 = vld [vmem:[#allocation9 + $0x1b8] sm:$0xff]
    %v393 = vld [vmem:[#allocation9 + $0x1c0] sm:$0xff]
    %v394 = vld [vmem:[#allocation9 + $0x1c8] sm:$0xff]
    %v395 = vld [vmem:[#allocation9 + $0x1d0] sm:$0xff]
    %v396 = vld [vmem:[#allocation9 + $0x1d8] sm:$0xff]
    %v397 = vld [vmem:[#allocation9 + $0x1e0] sm:$0xff]
    %v398 = vld [vmem:[#allocation9 + $0x1e8] sm:$0xff]
    %v399 = vld [vmem:[#allocation9 + $0x1f0] sm:$0xff]
    %v400 = vld [vmem:[#allocation9 + $0x1f8] sm:$0xff]
    %v401 = vld [vmem:[#allocation9 + $0x200] sm:$0xff]
    %v402 = vld [vmem:[#allocation9 + $0x208] sm:$0xff]
    %v403 = vld [vmem:[#allocation9 + $0x210] sm:$0xff]
    %v404 = vld [vmem:[#allocation9 + $0x218] sm:$0xff]
    %v405 = vld [vmem:[#allocation9 + $0x220] sm:$0xff]
    %v406 = vld [vmem:[#allocation9 + $0x228] sm:$0xff]
    %v407 = vld [vmem:[#allocation9 + $0x230] sm:$0xff]
    %v408 = vld [vmem:[#allocation9 + $0x238] sm:$0xff]
    %v409 = vld [vmem:[#allocation9 + $0x240] sm:$0xff]
    %v410 = vld [vmem:[#allocation9 + $0x248] sm:$0xff]
    %v411 = vld [vmem:[#allocation9 + $0x250] sm:$0xff]
    %v412 = vld [vmem:[#allocation9 + $0x258] sm:$0xff]
    %v413 = vld [vmem:[#allocation9 + $0x260] sm:$0xff]
    %v414 = vld [vmem:[#allocation9 + $0x268] sm:$0xff]
    %v415 = vld [vmem:[#allocation9 + $0x270] sm:$0xff]
    %v416 = vld [vmem:[#allocation9 + $0x278] sm:$0xff]
    %v417 = vld [vmem:[#allocation9 + $0x280] sm:$0xff]
    %v418 = vld [vmem:[#allocation9 + $0x288] sm:$0xff]
    %v419 = vld [vmem:[#allocation9 + $0x290] sm:$0xff]
    %v420 = vld [vmem:[#allocation9 + $0x298] sm:$0xff]
    %v421 = vld [vmem:[#allocation9 + $0x2a0] sm:$0xff]
    %v422 = vld [vmem:[#allocation9 + $0x2a8] sm:$0xff]
    %v423 = vld [vmem:[#allocation9 + $0x2b0] sm:$0xff]
    %v424 = vld [vmem:[#allocation9 + $0x2b8] sm:$0xff]
    %v425 = vld [vmem:[#allocation9 + $0x2c0] sm:$0xff]
    %v426 = vld [vmem:[#allocation9 + $0x2c8] sm:$0xff]
    %v427 = vld [vmem:[#allocation9 + $0x2d0] sm:$0xff]
    %v428 = vld [vmem:[#allocation9 + $0x2d8] sm:$0xff]
    %v429 = vld [vmem:[#allocation9 + $0x2e0] sm:$0xff]
    %v430 = vld [vmem:[#allocation9 + $0x2e8] sm:$0xff]
    %v431 = vld [vmem:[#allocation9 + $0x2f0] sm:$0xff]
    %v432 = vld [vmem:[#allocation9 + $0x2f8] sm:$0xff]
    %v433 = vld [vmem:[#allocation9 + $0x300] sm:$0xff]
    %v434 = vld [vmem:[#allocation9 + $0x308] sm:$0xff]
    %v435 = vld [vmem:[#allocation9 + $0x310] sm:$0xff]
    %v436 = vld [vmem:[#allocation9 + $0x318] sm:$0xff]
    %v437 = vld [vmem:[#allocation9 + $0x320] sm:$0xff]
    %v438 = vld [vmem:[#allocation9 + $0x328] sm:$0xff]
    %v439 = vld [vmem:[#allocation9 + $0x330] sm:$0xff]
    %v440 = vld [vmem:[#allocation9 + $0x338] sm:$0xff]
    %v441 = vld [vmem:[#allocation9 + $0x340] sm:$0xff]
    %v442 = vld [vmem:[#allocation9 + $0x348] sm:$0xff]
    %v443 = vld [vmem:[#allocation9 + $0x350] sm:$0xff]
    %v444 = vld [vmem:[#allocation9 + $0x358] sm:$0xff]
    %v445 = vld [vmem:[#allocation9 + $0x360] sm:$0xff]
    %v446 = vld [vmem:[#allocation9 + $0x368] sm:$0xff]
    %v447 = vld [vmem:[#allocation9 + $0x370] sm:$0xff]
    %v448 = vld [vmem:[#allocation9 + $0x378] sm:$0xff]
    %v449 = vld [vmem:[#allocation9 + $0x380] sm:$0xff]
    %v450 = vld [vmem:[#allocation9 + $0x388] sm:$0xff]
    %v451 = vld [vmem:[#allocation9 + $0x390] sm:$0xff]
    %v452 = vld [vmem:[#allocation9 + $0x398] sm:$0xff]
    %v453 = vld [vmem:[#allocation9 + $0x3a0] sm:$0xff]
    %v454 = vld [vmem:[#allocation9 + $0x3a8] sm:$0xff]
    %v455 = vld [vmem:[#allocation9 + $0x3b0] sm:$0xff]
    %v456 = vld [vmem:[#allocation9 + $0x3b8] sm:$0xff]
    %v457 = vld [vmem:[#allocation9 + $0x3c0] sm:$0xff]
    %v458 = vld [vmem:[#allocation9 + $0x3c8] sm:$0xff]
    %v459 = vld [vmem:[#allocation9 + $0x3d0] sm:$0xff]
    %v460 = vld [vmem:[#allocation9 + $0x3d8] sm:$0xff]
    %v461 = vld [vmem:[#allocation9 + $0x3e0] sm:$0xff]
    %v462 = vld [vmem:[#allocation9 + $0x3e8] sm:$0xff]
    %v463 = vld [vmem:[#allocation9 + $0x3f0] sm:$0xff]
    %v464 = vld [vmem:[#allocation9 + $0x3f8] sm:$0xff]
    %v465 = vld [vmem:[%s5] sm:$0xf]
    %v467 = vperm.slane %v465, 0
    %v468 = vperm.slane %v465, 1
    %v469 = vperm.slane %v465, 2
    %v470 = vperm.slane %v465, 3
    %475 = vmatpush.msra.mxu0 %v397
    %476 = vmatpush.msra.mxu0 %v393
    %477 = vmatpush.msra.mxu0 %v389
    %478 = vmatpush.msra.mxu0 %v385
    %479 = vmatpush.msra.mxu0 %v381
    %480 = vmatpush.msra.mxu0 %v377
    %481 = vmatpush.msra.mxu0 %v373
    %482 = vmatpush.msra.mxu0 %v369
    %483 = vmatpush.msra.mxu0 %v365
    %484 = vmatpush.msra.mxu0 %v361
    %485 = vmatpush.msra.mxu0 %v357
    %486 = vmatpush.msra.mxu0 %v353
    %487 = vmatpush.msra.mxu0 %v349
    %488 = vmatpush.msra.mxu0 %v345
    %489 = vmatpush.msra.mxu0 %v341
    %490 = vmatpush.msra.mxu0 %v337
    %491 = vmatmul.f32.gmra.mxu0 %v331
    %v492 = vpop.f32.mrf.mxu0
    %v493 = vadd.f32 %v467, %v492
    %494 = vmatmul.f32.gmra.mxu0 %v333
    %v495 = vpop.f32.mrf.mxu0
    %v496 = vadd.f32 %v467, %v495
    %497 = vdwg.mxu0
    %498 = vmatpush.msra.mxu0 %v461
    %499 = vmatpush.msra.mxu0 %v457
    %500 = vmatpush.msra.mxu0 %v453
    %501 = vmatpush.msra.mxu0 %v449
    %502 = vmatpush.msra.mxu0 %v445
    %503 = vmatpush.msra.mxu0 %v441
    %504 = vmatpush.msra.mxu0 %v437
    %505 = vmatpush.msra.mxu0 %v433
    %506 = vmatpush.msra.mxu0 %v429
    %507 = vmatpush.msra.mxu0 %v425
    %508 = vmatpush.msra.mxu0 %v421
    %509 = vmatpush.msra.mxu0 %v417
    %510 = vmatpush.msra.mxu0 %v413
    %511 = vmatpush.msra.mxu0 %v409
    %512 = vmatpush.msra.mxu0 %v405
    %513 = vmatpush.msra.mxu0 %v401
    %514 = vmatmul.f32.gmra.mxu0 %v332
    %v515 = vpop.f32.mrf.mxu0
    %v516 = vadd.f32 %v493, %v515
    %517 = vmatmul.f32.gmra.mxu0 %v334
    %v518 = vpop.f32.mrf.mxu0
    %v519 = vadd.f32 %v496, %v518
    %520 = vdwg.mxu0
    %521 = vmatpush.msra.mxu0 %v398
    %522 = vmatpush.msra.mxu0 %v394
    %523 = vmatpush.msra.mxu0 %v390
    %524 = vmatpush.msra.mxu0 %v386
    %525 = vmatpush.msra.mxu0 %v382
    %526 = vmatpush.msra.mxu0 %v378
    %527 = vmatpush.msra.mxu0 %v374
    %528 = vmatpush.msra.mxu0 %v370
    %529 = vmatpush.msra.mxu0 %v366
    %530 = vmatpush.msra.mxu0 %v362
    %531 = vmatpush.msra.mxu0 %v358
    %532 = vmatpush.msra.mxu0 %v354
    %533 = vmatpush.msra.mxu0 %v350
    %534 = vmatpush.msra.mxu0 %v346
    %535 = vmatpush.msra.mxu0 %v342
    %536 = vmatpush.msra.mxu0 %v338
    %537 = vmatmul.f32.gmra.mxu0 %v331
    %v538 = vpop.f32.mrf.mxu0
    %v539 = vadd.f32 %v468, %v538
    %540 = vmatmul.f32.gmra.mxu0 %v333
    %v541 = vpop.f32.mrf.mxu0
    %v542 = vadd.f32 %v468, %v541
    %543 = vdwg.mxu0
    %544 = vmatpush.msra.mxu0 %v462
    %545 = vmatpush.msra.mxu0 %v458
    %546 = vmatpush.msra.mxu0 %v454
    %547 = vmatpush.msra.mxu0 %v450
    %548 = vmatpush.msra.mxu0 %v446
    %549 = vmatpush.msra.mxu0 %v442
    %550 = vmatpush.msra.mxu0 %v438
    %551 = vmatpush.msra.mxu0 %v434
    %552 = vmatpush.msra.mxu0 %v430
    %553 = vmatpush.msra.mxu0 %v426
    %554 = vmatpush.msra.mxu0 %v422
    %555 = vmatpush.msra.mxu0 %v418
    %556 = vmatpush.msra.mxu0 %v414
    %557 = vmatpush.msra.mxu0 %v410
    %558 = vmatpush.msra.mxu0 %v406
    %559 = vmatpush.msra.mxu0 %v402
    %560 = vmatmul.f32.gmra.mxu0 %v332
    %v561 = vpop.f32.mrf.mxu0
    %v562 = vadd.f32 %v539, %v561
    %563 = vmatmul.f32.gmra.mxu0 %v334
    %v564 = vpop.f32.mrf.mxu0
    %v565 = vadd.f32 %v542, %v564
    %566 = vdwg.mxu0
    %567 = vmatpush.msra.mxu0 %v399
    %568 = vmatpush.msra.mxu0 %v395
    %569 = vmatpush.msra.mxu0 %v391
    %570 = vmatpush.msra.mxu0 %v387
    %571 = vmatpush.msra.mxu0 %v383
    %572 = vmatpush.msra.mxu0 %v379
    %573 = vmatpush.msra.mxu0 %v375
    %574 = vmatpush.msra.mxu0 %v371
    %575 = vmatpush.msra.mxu0 %v367
    %576 = vmatpush.msra.mxu0 %v363
    %577 = vmatpush.msra.mxu0 %v359
    %578 = vmatpush.msra.mxu0 %v355
    %579 = vmatpush.msra.mxu0 %v351
    %580 = vmatpush.msra.mxu0 %v347
    %581 = vmatpush.msra.mxu0 %v343
    %582 = vmatpush.msra.mxu0 %v339
    %583 = vmatmul.f32.gmra.mxu0 %v331
    %v584 = vpop.f32.mrf.mxu0
    %v585 = vadd.f32 %v469, %v584
    %586 = vmatmul.f32.gmra.mxu0 %v333
    %v587 = vpop.f32.mrf.mxu0
    %v588 = vadd.f32 %v469, %v587
    %589 = vdwg.mxu0
    %590 = vmatpush.msra.mxu0 %v463
    %591 = vmatpush.msra.mxu0 %v459
    %592 = vmatpush.msra.mxu0 %v455
    %593 = vmatpush.msra.mxu0 %v451
    %594 = vmatpush.msra.mxu0 %v447
    %595 = vmatpush.msra.mxu0 %v443
    %596 = vmatpush.msra.mxu0 %v439
    %597 = vmatpush.msra.mxu0 %v435
    %598 = vmatpush.msra.mxu0 %v431
    %599 = vmatpush.msra.mxu0 %v427
    %600 = vmatpush.msra.mxu0 %v423
    %601 = vmatpush.msra.mxu0 %v419
    %602 = vmatpush.msra.mxu0 %v415
    %603 = vmatpush.msra.mxu0 %v411
    %604 = vmatpush.msra.mxu0 %v407
    %605 = vmatpush.msra.mxu0 %v403
    %606 = vmatmul.f32.gmra.mxu0 %v332
    %v607 = vpop.f32.mrf.mxu0
    %v608 = vadd.f32 %v585, %v607
    %609 = vmatmul.f32.gmra.mxu0 %v334
    %v610 = vpop.f32.mrf.mxu0
    %v611 = vadd.f32 %v588, %v610
    %612 = vdwg.mxu0
    %613 = vmatpush.msra.mxu0 %v400
    %614 = vmatpush.msra.mxu0 %v396
    %615 = vmatpush.msra.mxu0 %v392
    %616 = vmatpush.msra.mxu0 %v388
    %617 = vmatpush.msra.mxu0 %v384
    %618 = vmatpush.msra.mxu0 %v380
    %619 = vmatpush.msra.mxu0 %v376
    %620 = vmatpush.msra.mxu0 %v372
    %621 = vmatpush.msra.mxu0 %v368
    %622 = vmatpush.msra.mxu0 %v364
    %623 = vmatpush.msra.mxu0 %v360
    %624 = vmatpush.msra.mxu0 %v356
    %625 = vmatpush.msra.mxu0 %v352
    %626 = vmatpush.msra.mxu0 %v348
    %627 = vmatpush.msra.mxu0 %v344
    %628 = vmatpush.msra.mxu0 %v340
    %629 = vmatmul.f32.gmra.mxu0 %v331
    %v630 = vpop.f32.mrf.mxu0
    %v631 = vadd.f32 %v470, %v630
    %632 = vmatmul.f32.gmra.mxu0 %v333
    %v633 = vpop.f32.mrf.mxu0
    %v634 = vadd.f32 %v470, %v633
    %635 = vdwg.mxu0
    %636 = vmatpush.msra.mxu0 %v464
    %637 = vmatpush.msra.mxu0 %v460
    %638 = vmatpush.msra.mxu0 %v456
    %639 = vmatpush.msra.mxu0 %v452
    %640 = vmatpush.msra.mxu0 %v448
    %641 = vmatpush.msra.mxu0 %v444
    %642 = vmatpush.msra.mxu0 %v440
    %643 = vmatpush.msra.mxu0 %v436
    %644 = vmatpush.msra.mxu0 %v432
    %645 = vmatpush.msra.mxu0 %v428
    %646 = vmatpush.msra.mxu0 %v424
    %647 = vmatpush.msra.mxu0 %v420
    %648 = vmatpush.msra.mxu0 %v416
    %649 = vmatpush.msra.mxu0 %v412
    %650 = vmatpush.msra.mxu0 %v408
    %651 = vmatpush.msra.mxu0 %v404
    %652 = vmatmul.f32.gmra.mxu0 %v332
    %v653 = vpop.f32.mrf.mxu0
    %v654 = vadd.f32 %v631, %v653
    %655 = vmatmul.f32.gmra.mxu0 %v334
    %v656 = vpop.f32.mrf.mxu0
    %v657 = vadd.f32 %v634, %v656
    %658 = vdwg.mxu0
    %v659 = vmax.f32 %v516, 0.0
    %v660 = vmax.f32 %v562, 0.0
    %v661 = vmax.f32 %v608, 0.0
    %v662 = vmax.f32 %v654, 0.0
    %v663 = vmax.f32 %v519, 0.0
    %v664 = vmax.f32 %v565, 0.0
    %v665 = vmax.f32 %v611, 0.0
    %v666 = vmax.f32 %v657, 0.0
    %v667 = vld [vmem:[#allocation10] sm:$0xff]
    %v668 = vld [vmem:[#allocation10 + $0x8] sm:$0xff]
    %v669 = vld [vmem:[#allocation10 + $0x10] sm:$0xff]
    %v670 = vld [vmem:[#allocation10 + $0x18] sm:$0xff]
    %v671 = vld [vmem:[#allocation10 + $0x20] sm:$0xff]
    %v672 = vld [vmem:[#allocation10 + $0x28] sm:$0xff]
    %v673 = vld [vmem:[#allocation10 + $0x30] sm:$0xff]
    %v674 = vld [vmem:[#allocation10 + $0x38] sm:$0xff]
    %v675 = vld [vmem:[#allocation10 + $0x40] sm:$0xff]
    %v676 = vld [vmem:[#allocation10 + $0x48] sm:$0xff]
    %v677 = vld [vmem:[#allocation10 + $0x50] sm:$0xff]
    %v678 = vld [vmem:[#allocation10 + $0x58] sm:$0xff]
    %v679 = vld [vmem:[#allocation10 + $0x60] sm:$0xff]
    %v680 = vld [vmem:[#allocation10 + $0x68] sm:$0xff]
    %v681 = vld [vmem:[#allocation10 + $0x70] sm:$0xff]
    %v682 = vld [vmem:[#allocation10 + $0x78] sm:$0xff]
    %v683 = vld [vmem:[#allocation10 + $0x80] sm:$0xff]
    %v684 = vld [vmem:[#allocation10 + $0x88] sm:$0xff]
    %v685 = vld [vmem:[#allocation10 + $0x90] sm:$0xff]
    %v686 = vld [vmem:[#allocation10 + $0x98] sm:$0xff]
    %v687 = vld [vmem:[#allocation10 + $0xa0] sm:$0xff]
    %v688 = vld [vmem:[#allocation10 + $0xa8] sm:$0xff]
    %v689 = vld [vmem:[#allocation10 + $0xb0] sm:$0xff]
    %v690 = vld [vmem:[#allocation10 + $0xb8] sm:$0xff]
    %v691 = vld [vmem:[#allocation10 + $0xc0] sm:$0xff]
    %v692 = vld [vmem:[#allocation10 + $0xc8] sm:$0xff]
    %v693 = vld [vmem:[#allocation10 + $0xd0] sm:$0xff]
    %v694 = vld [vmem:[#allocation10 + $0xd8] sm:$0xff]
    %v695 = vld [vmem:[#allocation10 + $0xe0] sm:$0xff]
    %v696 = vld [vmem:[#allocation10 + $0xe8] sm:$0xff]
    %v697 = vld [vmem:[#allocation10 + $0xf0] sm:$0xff]
    %v698 = vld [vmem:[#allocation10 + $0xf8] sm:$0xff]
    %v699 = vld [vmem:[#allocation10 + $0x100] sm:$0xff]
    %v700 = vld [vmem:[#allocation10 + $0x108] sm:$0xff]
    %v701 = vld [vmem:[#allocation10 + $0x110] sm:$0xff]
    %v702 = vld [vmem:[#allocation10 + $0x118] sm:$0xff]
    %v703 = vld [vmem:[#allocation10 + $0x120] sm:$0xff]
    %v704 = vld [vmem:[#allocation10 + $0x128] sm:$0xff]
    %v705 = vld [vmem:[#allocation10 + $0x130] sm:$0xff]
    %v706 = vld [vmem:[#allocation10 + $0x138] sm:$0xff]
    %v707 = vld [vmem:[#allocation10 + $0x140] sm:$0xff]
    %v708 = vld [vmem:[#allocation10 + $0x148] sm:$0xff]
    %v709 = vld [vmem:[#allocation10 + $0x150] sm:$0xff]
    %v710 = vld [vmem:[#allocation10 + $0x158] sm:$0xff]
    %v711 = vld [vmem:[#allocation10 + $0x160] sm:$0xff]
    %v712 = vld [vmem:[#allocation10 + $0x168] sm:$0xff]
    %v713 = vld [vmem:[#allocation10 + $0x170] sm:$0xff]
    %v714 = vld [vmem:[#allocation10 + $0x178] sm:$0xff]
    %v715 = vld [vmem:[#allocation10 + $0x180] sm:$0xff]
    %v716 = vld [vmem:[#allocation10 + $0x188] sm:$0xff]
    %v717 = vld [vmem:[#allocation10 + $0x190] sm:$0xff]
    %v718 = vld [vmem:[#allocation10 + $0x198] sm:$0xff]
    %v719 = vld [vmem:[#allocation10 + $0x1a0] sm:$0xff]
    %v720 = vld [vmem:[#allocation10 + $0x1a8] sm:$0xff]
    %v721 = vld [vmem:[#allocation10 + $0x1b0] sm:$0xff]
    %v722 = vld [vmem:[#allocation10 + $0x1b8] sm:$0xff]
    %v723 = vld [vmem:[#allocation10 + $0x1c0] sm:$0xff]
    %v724 = vld [vmem:[#allocation10 + $0x1c8] sm:$0xff]
    %v725 = vld [vmem:[#allocation10 + $0x1d0] sm:$0xff]
    %v726 = vld [vmem:[#allocation10 + $0x1d8] sm:$0xff]
    %v727 = vld [vmem:[#allocation10 + $0x1e0] sm:$0xff]
    %v728 = vld [vmem:[#allocation10 + $0x1e8] sm:$0xff]
    %v729 = vld [vmem:[#allocation10 + $0x1f0] sm:$0xff]
    %v730 = vld [vmem:[#allocation10 + $0x1f8] sm:$0xff]
    %v731 = vld [vmem:[#allocation10 + $0x200] sm:$0xff]
    %v732 = vld [vmem:[#allocation10 + $0x208] sm:$0xff]
    %v733 = vld [vmem:[#allocation10 + $0x210] sm:$0xff]
    %v734 = vld [vmem:[#allocation10 + $0x218] sm:$0xff]
    %v735 = vld [vmem:[#allocation10 + $0x220] sm:$0xff]
    %v736 = vld [vmem:[#allocation10 + $0x228] sm:$0xff]
    %v737 = vld [vmem:[#allocation10 + $0x230] sm:$0xff]
    %v738 = vld [vmem:[#allocation10 + $0x238] sm:$0xff]
    %v739 = vld [vmem:[#allocation10 + $0x240] sm:$0xff]
    %v740 = vld [vmem:[#allocation10 + $0x248] sm:$0xff]
    %v741 = vld [vmem:[#allocation10 + $0x250] sm:$0xff]
    %v742 = vld [vmem:[#allocation10 + $0x258] sm:$0xff]
    %v743 = vld [vmem:[#allocation10 + $0x260] sm:$0xff]
    %v744 = vld [vmem:[#allocation10 + $0x268] sm:$0xff]
    %v745 = vld [vmem:[#allocation10 + $0x270] sm:$0xff]
    %v746 = vld [vmem:[#allocation10 + $0x278] sm:$0xff]
    %v747 = vld [vmem:[#allocation10 + $0x280] sm:$0xff]
    %v748 = vld [vmem:[#allocation10 + $0x288] sm:$0xff]
    %v749 = vld [vmem:[#allocation10 + $0x290] sm:$0xff]
    %v750 = vld [vmem:[#allocation10 + $0x298] sm:$0xff]
    %v751 = vld [vmem:[#allocation10 + $0x2a0] sm:$0xff]
    %v752 = vld [vmem:[#allocation10 + $0x2a8] sm:$0xff]
    %v753 = vld [vmem:[#allocation10 + $0x2b0] sm:$0xff]
    %v754 = vld [vmem:[#allocation10 + $0x2b8] sm:$0xff]
    %v755 = vld [vmem:[#allocation10 + $0x2c0] sm:$0xff]
    %v756 = vld [vmem:[#allocation10 + $0x2c8] sm:$0xff]
    %v757 = vld [vmem:[#allocation10 + $0x2d0] sm:$0xff]
    %v758 = vld [vmem:[#allocation10 + $0x2d8] sm:$0xff]
    %v759 = vld [vmem:[#allocation10 + $0x2e0] sm:$0xff]
    %v760 = vld [vmem:[#allocation10 + $0x2e8] sm:$0xff]
    %v761 = vld [vmem:[#allocation10 + $0x2f0] sm:$0xff]
    %v762 = vld [vmem:[#allocation10 + $0x2f8] sm:$0xff]
    %v763 = vld [vmem:[#allocation10 + $0x300] sm:$0xff]
    %v764 = vld [vmem:[#allocation10 + $0x308] sm:$0xff]
    %v765 = vld [vmem:[#allocation10 + $0x310] sm:$0xff]
    %v766 = vld [vmem:[#allocation10 + $0x318] sm:$0xff]
    %v767 = vld [vmem:[#allocation10 + $0x320] sm:$0xff]
    %v768 = vld [vmem:[#allocation10 + $0x328] sm:$0xff]
    %v769 = vld [vmem:[#allocation10 + $0x330] sm:$0xff]
    %v770 = vld [vmem:[#allocation10 + $0x338] sm:$0xff]
    %v771 = vld [vmem:[#allocation10 + $0x340] sm:$0xff]
    %v772 = vld [vmem:[#allocation10 + $0x348] sm:$0xff]
    %v773 = vld [vmem:[#allocation10 + $0x350] sm:$0xff]
    %v774 = vld [vmem:[#allocation10 + $0x358] sm:$0xff]
    %v775 = vld [vmem:[#allocation10 + $0x360] sm:$0xff]
    %v776 = vld [vmem:[#allocation10 + $0x368] sm:$0xff]
    %v777 = vld [vmem:[#allocation10 + $0x370] sm:$0xff]
    %v778 = vld [vmem:[#allocation10 + $0x378] sm:$0xff]
    %v779 = vld [vmem:[#allocation10 + $0x380] sm:$0xff]
    %v780 = vld [vmem:[#allocation10 + $0x388] sm:$0xff]
    %v781 = vld [vmem:[#allocation10 + $0x390] sm:$0xff]
    %v782 = vld [vmem:[#allocation10 + $0x398] sm:$0xff]
    %v783 = vld [vmem:[#allocation10 + $0x3a0] sm:$0xff]
    %v784 = vld [vmem:[#allocation10 + $0x3a8] sm:$0xff]
    %v785 = vld [vmem:[#allocation10 + $0x3b0] sm:$0xff]
    %v786 = vld [vmem:[#allocation10 + $0x3b8] sm:$0xff]
    %v787 = vld [vmem:[#allocation10 + $0x3c0] sm:$0xff]
    %v788 = vld [vmem:[#allocation10 + $0x3c8] sm:$0xff]
    %v789 = vld [vmem:[#allocation10 + $0x3d0] sm:$0xff]
    %v790 = vld [vmem:[#allocation10 + $0x3d8] sm:$0xff]
    %v791 = vld [vmem:[#allocation10 + $0x3e0] sm:$0xff]
    %v792 = vld [vmem:[#allocation10 + $0x3e8] sm:$0xff]
    %v793 = vld [vmem:[#allocation10 + $0x3f0] sm:$0xff]
    %v794 = vld [vmem:[#allocation10 + $0x3f8] sm:$0xff]
    %v795 = vld [vmem:[#allocation12] sm:$0x3]
    %v797 = vperm.slane %v795, 0
    %v798 = vperm.slane %v795, 1
    %801 = vmatpush.msra.mxu0 %v697
    %802 = vmatpush.msra.mxu0 %v695
    %803 = vmatpush.msra.mxu0 %v693
    %804 = vmatpush.msra.mxu0 %v691
    %805 = vmatpush.msra.mxu0 %v689
    %806 = vmatpush.msra.mxu0 %v687
    %807 = vmatpush.msra.mxu0 %v685
    %808 = vmatpush.msra.mxu0 %v683
    %809 = vmatpush.msra.mxu0 %v681
    %810 = vmatpush.msra.mxu0 %v679
    %811 = vmatpush.msra.mxu0 %v677
    %812 = vmatpush.msra.mxu0 %v675
    %813 = vmatpush.msra.mxu0 %v673
    %814 = vmatpush.msra.mxu0 %v671
    %815 = vmatpush.msra.mxu0 %v669
    %816 = vmatpush.msra.mxu0 %v667
    %817 = vmatmul.f32.gmra.mxu0 %v659
    %v818 = vpop.f32.mrf.mxu0
    %v819 = vadd.f32 %v797, %v818
    %820 = vmatmul.f32.gmra.mxu0 %v663
    %v821 = vpop.f32.mrf.mxu0
    %v822 = vadd.f32 %v797, %v821
    %823 = vdwg.mxu0
    %824 = vmatpush.msra.mxu0 %v729
    %825 = vmatpush.msra.mxu0 %v727
    %826 = vmatpush.msra.mxu0 %v725
    %827 = vmatpush.msra.mxu0 %v723
    %828 = vmatpush.msra.mxu0 %v721
    %829 = vmatpush.msra.mxu0 %v719
    %830 = vmatpush.msra.mxu0 %v717
    %831 = vmatpush.msra.mxu0 %v715
    %832 = vmatpush.msra.mxu0 %v713
    %833 = vmatpush.msra.mxu0 %v711
    %834 = vmatpush.msra.mxu0 %v709
    %835 = vmatpush.msra.mxu0 %v707
    %836 = vmatpush.msra.mxu0 %v705
    %837 = vmatpush.msra.mxu0 %v703
    %838 = vmatpush.msra.mxu0 %v701
    %839 = vmatpush.msra.mxu0 %v699
    %840 = vmatmul.f32.gmra.mxu0 %v660
    %v841 = vpop.f32.mrf.mxu0
    %v842 = vadd.f32 %v819, %v841
    %843 = vmatmul.f32.gmra.mxu0 %v664
    %v844 = vpop.f32.mrf.mxu0
    %v845 = vadd.f32 %v822, %v844
    %846 = vdwg.mxu0
    %847 = vmatpush.msra.mxu0 %v761
    %848 = vmatpush.msra.mxu0 %v759
    %849 = vmatpush.msra.mxu0 %v757
    %850 = vmatpush.msra.mxu0 %v755
    %851 = vmatpush.msra.mxu0 %v753
    %852 = vmatpush.msra.mxu0 %v751
    %853 = vmatpush.msra.mxu0 %v749
    %854 = vmatpush.msra.mxu0 %v747
    %855 = vmatpush.msra.mxu0 %v745
    %856 = vmatpush.msra.mxu0 %v743
    %857 = vmatpush.msra.mxu0 %v741
    %858 = vmatpush.msra.mxu0 %v739
    %859 = vmatpush.msra.mxu0 %v737
    %860 = vmatpush.msra.mxu0 %v735
    %861 = vmatpush.msra.mxu0 %v733
    %862 = vmatpush.msra.mxu0 %v731
    %863 = vmatmul.f32.gmra.mxu0 %v661
    %v864 = vpop.f32.mrf.mxu0
    %v865 = vadd.f32 %v842, %v864
    %866 = vmatmul.f32.gmra.mxu0 %v665
    %v867 = vpop.f32.mrf.mxu0
    %v868 = vadd.f32 %v845, %v867
    %869 = vdwg.mxu0
    %870 = vmatpush.msra.mxu0 %v793
    %871 = vmatpush.msra.mxu0 %v791
    %872 = vmatpush.msra.mxu0 %v789
    %873 = vmatpush.msra.mxu0 %v787
    %874 = vmatpush.msra.mxu0 %v785
    %875 = vmatpush.msra.mxu0 %v783
    %876 = vmatpush.msra.mxu0 %v781
    %877 = vmatpush.msra.mxu0 %v779
    %878 = vmatpush.msra.mxu0 %v777
    %879 = vmatpush.msra.mxu0 %v775
    %880 = vmatpush.msra.mxu0 %v773
    %881 = vmatpush.msra.mxu0 %v771
    %882 = vmatpush.msra.mxu0 %v769
    %883 = vmatpush.msra.mxu0 %v767
    %884 = vmatpush.msra.mxu0 %v765
    %885 = vmatpush.msra.mxu0 %v763
    %886 = vmatmul.f32.gmra.mxu0 %v662
    %v887 = vpop.f32.mrf.mxu0
    %v888 = vadd.f32 %v865, %v887
    %889 = vmatmul.f32.gmra.mxu0 %v666
    %v890 = vpop.f32.mrf.mxu0
    %v891 = vadd.f32 %v868, %v890
    %892 = vdwg.mxu0
    %893 = vmatpush.msra.mxu0 %v698
    %894 = vmatpush.msra.mxu0 %v696
    %895 = vmatpush.msra.mxu0 %v694
    %896 = vmatpush.msra.mxu0 %v692
    %897 = vmatpush.msra.mxu0 %v690
    %898 = vmatpush.msra.mxu0 %v688
    %899 = vmatpush.msra.mxu0 %v686
    %900 = vmatpush.msra.mxu0 %v684
    %901 = vmatpush.msra.mxu0 %v682
    %902 = vmatpush.msra.mxu0 %v680
    %903 = vmatpush.msra.mxu0 %v678
    %904 = vmatpush.msra.mxu0 %v676
    %905 = vmatpush.msra.mxu0 %v674
    %906 = vmatpush.msra.mxu0 %v672
    %907 = vmatpush.msra.mxu0 %v670
    %908 = vmatpush.msra.mxu0 %v668
    %909 = vmatmul.f32.gmra.mxu0 %v659
    %v910 = vpop.f32.mrf.mxu0
    %v911 = vadd.f32 %v798, %v910
    %912 = vmatmul.f32.gmra.mxu0 %v663
    %v913 = vpop.f32.mrf.mxu0
    %v914 = vadd.f32 %v798, %v913
    %915 = vdwg.mxu0
    %916 = vmatpush.msra.mxu0 %v730
    %917 = vmatpush.msra.mxu0 %v728
    %918 = vmatpush.msra.mxu0 %v726
    %919 = vmatpush.msra.mxu0 %v724
    %920 = vmatpush.msra.mxu0 %v722
    %921 = vmatpush.msra.mxu0 %v720
    %922 = vmatpush.msra.mxu0 %v718
    %923 = vmatpush.msra.mxu0 %v716
    %924 = vmatpush.msra.mxu0 %v714
    %925 = vmatpush.msra.mxu0 %v712
    %926 = vmatpush.msra.mxu0 %v710
    %927 = vmatpush.msra.mxu0 %v708
    %928 = vmatpush.msra.mxu0 %v706
    %929 = vmatpush.msra.mxu0 %v704
    %930 = vmatpush.msra.mxu0 %v702
    %931 = vmatpush.msra.mxu0 %v700
    %932 = vmatmul.f32.gmra.mxu0 %v660
    %v933 = vpop.f32.mrf.mxu0
    %v934 = vadd.f32 %v911, %v933
    %935 = vmatmul.f32.gmra.mxu0 %v664
    %v936 = vpop.f32.mrf.mxu0
    %v937 = vadd.f32 %v914, %v936
    %938 = vdwg.mxu0
    %939 = vmatpush.msra.mxu0 %v762
    %940 = vmatpush.msra.mxu0 %v760
    %941 = vmatpush.msra.mxu0 %v758
    %942 = vmatpush.msra.mxu0 %v756
    %943 = vmatpush.msra.mxu0 %v754
    %944 = vmatpush.msra.mxu0 %v752
    %945 = vmatpush.msra.mxu0 %v750
    %946 = vmatpush.msra.mxu0 %v748
    %947 = vmatpush.msra.mxu0 %v746
    %948 = vmatpush.msra.mxu0 %v744
    %949 = vmatpush.msra.mxu0 %v742
    %950 = vmatpush.msra.mxu0 %v740
    %951 = vmatpush.msra.mxu0 %v738
    %952 = vmatpush.msra.mxu0 %v736
    %953 = vmatpush.msra.mxu0 %v734
    %954 = vmatpush.msra.mxu0 %v732
    %955 = vmatmul.f32.gmra.mxu0 %v661
    %v956 = vpop.f32.mrf.mxu0
    %v957 = vadd.f32 %v934, %v956
    %958 = vmatmul.f32.gmra.mxu0 %v665
    %v959 = vpop.f32.mrf.mxu0
    %v960 = vadd.f32 %v937, %v959
    %961 = vdwg.mxu0
    %962 = vmatpush.msra.mxu0 %v794
    %963 = vmatpush.msra.mxu0 %v792
    %964 = vmatpush.msra.mxu0 %v790
    %965 = vmatpush.msra.mxu0 %v788
    %966 = vmatpush.msra.mxu0 %v786
    %967 = vmatpush.msra.mxu0 %v784
    %968 = vmatpush.msra.mxu0 %v782
    %969 = vmatpush.msra.mxu0 %v780
    %970 = vmatpush.msra.mxu0 %v778
    %971 = vmatpush.msra.mxu0 %v776
    %972 = vmatpush.msra.mxu0 %v774
    %973 = vmatpush.msra.mxu0 %v772
    %974 = vmatpush.msra.mxu0 %v770
    %975 = vmatpush.msra.mxu0 %v768
    %976 = vmatpush.msra.mxu0 %v766
    %977 = vmatpush.msra.mxu0 %v764
    %978 = vmatmul.f32.gmra.mxu0 %v662
    %v979 = vpop.f32.mrf.mxu0
    %v980 = vadd.f32 %v957, %v979
    %981 = vmatmul.f32.gmra.mxu0 %v666
    %v982 = vpop.f32.mrf.mxu0
    %v983 = vadd.f32 %v960, %v982
    %984 = vdwg.mxu0
    %v985 = vmax.f32 %v888, 0.0
    %v986 = vmax.f32 %v980, 0.0
    %v987 = vmax.f32 %v891, 0.0
    %v988 = vmax.f32 %v983, 0.0
    %v989 = vld [vmem:[#allocation13] sm:$0xff]
    %v990 = vld [vmem:[#allocation13 + $0x8] sm:$0xff]
    %v991 = vld [vmem:[#allocation13 + $0x10] sm:$0xff]
    %v992 = vld [vmem:[#allocation13 + $0x18] sm:$0xff]
    %v993 = vld [vmem:[#allocation13 + $0x20] sm:$0xff]
    %v994 = vld [vmem:[#allocation13 + $0x28] sm:$0xff]
    %v995 = vld [vmem:[#allocation13 + $0x30] sm:$0xff]
    %v996 = vld [vmem:[#allocation13 + $0x38] sm:$0xff]
    %v997 = vld [vmem:[#allocation13 + $0x40] sm:$0xff]
    %v998 = vld [vmem:[#allocation13 + $0x48] sm:$0xff]
    %v999 = vld [vmem:[#allocation13 + $0x50] sm:$0xff]
    %v1000 = vld [vmem:[#allocation13 + $0x58] sm:$0xff]
    %v1001 = vld [vmem:[#allocation13 + $0x60] sm:$0xff]
    %v1002 = vld [vmem:[#allocation13 + $0x68] sm:$0xff]
    %v1003 = vld [vmem:[#allocation13 + $0x70] sm:$0xff]
    %v1004 = vld [vmem:[#allocation13 + $0x78] sm:$0xff]
    %v1005 = vld [vmem:[#allocation13 + $0x80] sm:$0xff]
    %v1006 = vld [vmem:[#allocation13 + $0x88] sm:$0xff]
    %v1007 = vld [vmem:[#allocation13 + $0x90] sm:$0xff]
    %v1008 = vld [vmem:[#allocation13 + $0x98] sm:$0xff]
    %v1009 = vld [vmem:[#allocation13 + $0xa0] sm:$0xff]
    %v1010 = vld [vmem:[#allocation13 + $0xa8] sm:$0xff]
    %v1011 = vld [vmem:[#allocation13 + $0xb0] sm:$0xff]
    %v1012 = vld [vmem:[#allocation13 + $0xb8] sm:$0xff]
    %v1013 = vld [vmem:[#allocation13 + $0xc0] sm:$0xff]
    %v1014 = vld [vmem:[#allocation13 + $0xc8] sm:$0xff]
    %v1015 = vld [vmem:[#allocation13 + $0xd0] sm:$0xff]
    %v1016 = vld [vmem:[#allocation13 + $0xd8] sm:$0xff]
    %v1017 = vld [vmem:[#allocation13 + $0xe0] sm:$0xff]
    %v1018 = vld [vmem:[#allocation13 + $0xe8] sm:$0xff]
    %v1019 = vld [vmem:[#allocation13 + $0xf0] sm:$0xff]
    %v1020 = vld [vmem:[#allocation13 + $0xf8] sm:$0xff]
    %v1021 = vld [vmem:[#allocation15] sm:$0x1]
    %v1023 = vperm.slane %v1021, 0
    %1025 = vmatpush.msra.mxu0 %v1004
    %1026 = vmatpush.msra.mxu0 %v1003
    %1027 = vmatpush.msra.mxu0 %v1002
    %1028 = vmatpush.msra.mxu0 %v1001
    %1029 = vmatpush.msra.mxu0 %v1000
    %1030 = vmatpush.msra.mxu0 %v999
    %1031 = vmatpush.msra.mxu0 %v998
    %1032 = vmatpush.msra.mxu0 %v997
    %1033 = vmatpush.msra.mxu0 %v996
    %1034 = vmatpush.msra.mxu0 %v995
    %1035 = vmatpush.msra.mxu0 %v994
    %1036 = vmatpush.msra.mxu0 %v993
    %1037 = vmatpush.msra.mxu0 %v992
    %1038 = vmatpush.msra.mxu0 %v991
    %1039 = vmatpush.msra.mxu0 %v990
    %1040 = vmatpush.msra.mxu0 %v989
    %1041 = vmatmul.f32.gmra.mxu0 %v985
    %v1042 = vpop.f32.mrf.mxu0
    %v1043 = vadd.f32 %v1023, %v1042
    %1044 = vmatmul.f32.gmra.mxu0 %v987
    %v1045 = vpop.f32.mrf.mxu0
    %v1046 = vadd.f32 %v1023, %v1045
    %1047 = vdwg.mxu0
    %1048 = vmatpush.msra.mxu0 %v1020
    %1049 = vmatpush.msra.mxu0 %v1019
    %1050 = vmatpush.msra.mxu0 %v1018
    %1051 = vmatpush.msra.mxu0 %v1017
    %1052 = vmatpush.msra.mxu0 %v1016
    %1053 = vmatpush.msra.mxu0 %v1015
    %1054 = vmatpush.msra.mxu0 %v1014
    %1055 = vmatpush.msra.mxu0 %v1013
    %1056 = vmatpush.msra.mxu0 %v1012
    %1057 = vmatpush.msra.mxu0 %v1011
    %1058 = vmatpush.msra.mxu0 %v1010
    %1059 = vmatpush.msra.mxu0 %v1009
    %1060 = vmatpush.msra.mxu0 %v1008
    %1061 = vmatpush.msra.mxu0 %v1007
    %1062 = vmatpush.msra.mxu0 %v1006
    %1063 = vmatpush.msra.mxu0 %v1005
    %1064 = vmatmul.f32.gmra.mxu0 %v986
    %v1065 = vpop.f32.mrf.mxu0
    %v1066 = vadd.f32 %v1043, %v1065
    %1067 = vmatmul.f32.gmra.mxu0 %v988
    %v1068 = vpop.f32.mrf.mxu0
    %v1069 = vadd.f32 %v1046, %v1068
    %1070 = vdwg.mxu0
    %v1071 = vmax.f32 %v1066, 0.0
    %v1072 = vmax.f32 %v1069, 0.0
    %v1073 = vld [vmem:[#allocation16] sm:$0xff]
    %v1074 = vld [vmem:[#allocation16 + $0x8] sm:$0xff]
    %v1075 = vld [vmem:[#allocation16 + $0x10] sm:$0xff]
    %v1076 = vld [vmem:[#allocation16 + $0x18] sm:$0xff]
    %v1077 = vld [vmem:[#allocation16 + $0x20] sm:$0xff]
    %v1078 = vld [vmem:[#allocation16 + $0x28] sm:$0xff]
    %v1079 = vld [vmem:[#allocation16 + $0x30] sm:$0xff]
    %v1080 = vld [vmem:[#allocation16 + $0x38] sm:$0xff]
    %v1081 = vld [vmem:[#allocation16 + $0x40] sm:$0xff]
    %v1082 = vld [vmem:[#allocation16 + $0x48] sm:$0xff]
    %v1083 = vld [vmem:[#allocation16 + $0x50] sm:$0xff]
    %v1084 = vld [vmem:[#allocation16 + $0x58] sm:$0xff]
    %v1085 = vld [vmem:[#allocation16 + $0x60] sm:$0xff]
    %v1086 = vld [vmem:[#allocation16 + $0x68] sm:$0xff]
    %v1087 = vld [vmem:[#allocation16 + $0x70] sm:$0xff]
    %v1088 = vld [vmem:[#allocation16 + $0x78] sm:$0xff]
    %v1089 = vld [vmem:[#allocation18] sm:$0x1]
    %v1091 = vperm.slane %v1089, 0
    %1093 = vmatpush.msra.mxu0 %v1088
    %1094 = vmatpush.msra.mxu0 %v1087
    %1095 = vmatpush.msra.mxu0 %v1086
    %1096 = vmatpush.msra.mxu0 %v1085
    %1097 = vmatpush.msra.mxu0 %v1084
    %1098 = vmatpush.msra.mxu0 %v1083
    %1099 = vmatpush.msra.mxu0 %v1082
    %1100 = vmatpush.msra.mxu0 %v1081
    %1101 = vmatpush.msra.mxu0 %v1080
    %1102 = vmatpush.msra.mxu0 %v1079
    %1103 = vmatpush.msra.mxu0 %v1078
    %1104 = vmatpush.msra.mxu0 %v1077
    %1105 = vmatpush.msra.mxu0 %v1076
    %1106 = vmatpush.msra.mxu0 %v1075
    %1107 = vmatpush.msra.mxu0 %v1074
    %1108 = vmatpush.msra.mxu0 %v1073
    %1109 = vmatmul.f32.gmra.mxu0 %v1071
    %v1110 = vpop.f32.mrf.mxu0
    %v1111 = vadd.f32 %v1091, %v1110
    %1112 = vmatmul.f32.gmra.mxu0 %v1072
    %v1113 = vpop.f32.mrf.mxu0
    %v1114 = vadd.f32 %v1091, %v1113
    %1115 = vdwg.mxu0
    %v1116 = vld [vmem:[#allocation19] sm:$0xff]
    %v1117 = vld [vmem:[#allocation19 + $0x8] sm:$0xff]
    %v1118 = vld [vmem:[#allocation19 + $0x10] sm:$0xff]
    %v1119 = vld [vmem:[#allocation19 + $0x18] sm:$0xff]
    %v1120 = vld [vmem:[#allocation19 + $0x20] sm:$0xff]
    %v1121 = vld [vmem:[#allocation19 + $0x28] sm:$0xff]
    %v1122 = vld [vmem:[#allocation19 + $0x30] sm:$0xff]
    %v1123 = vld [vmem:[#allocation19 + $0x38] sm:$0xff]
    %v1124 = vld [vmem:[#allocation19 + $0x40] sm:$0xff]
    %v1125 = vld [vmem:[#allocation19 + $0x48] sm:$0xff]
    %v1126 = vld [vmem:[#allocation19 + $0x50] sm:$0xff]
    %v1127 = vld [vmem:[#allocation19 + $0x58] sm:$0xff]
    %v1128 = vld [vmem:[#allocation19 + $0x60] sm:$0xff]
    %v1129 = vld [vmem:[#allocation19 + $0x68] sm:$0xff]
    %v1130 = vld [vmem:[#allocation19 + $0x70] sm:$0xff]
    %v1131 = vld [vmem:[#allocation19 + $0x78] sm:$0xff]
    %v1132 = vld [vmem:[%s13] sm:$0x1]
    %v1134 = vperm.slane %v1132, 0
    %1136 = vmatpush.msra.mxu0 %v1131
    %1137 = vmatpush.msra.mxu0 %v1130
    %1138 = vmatpush.msra.mxu0 %v1129
    %1139 = vmatpush.msra.mxu0 %v1128
    %1140 = vmatpush.msra.mxu0 %v1127
    %1141 = vmatpush.msra.mxu0 %v1126
    %1142 = vmatpush.msra.mxu0 %v1125
    %1143 = vmatpush.msra.mxu0 %v1124
    %1144 = vmatpush.msra.mxu0 %v1123
    %1145 = vmatpush.msra.mxu0 %v1122
    %1146 = vmatpush.msra.mxu0 %v1121
    %1147 = vmatpush.msra.mxu0 %v1120
    %1148 = vmatpush.msra.mxu0 %v1119
    %1149 = vmatpush.msra.mxu0 %v1118
    %1150 = vmatpush.msra.mxu0 %v1117
    %1151 = vmatpush.msra.mxu0 %v1116
    %1152 = vmatmul.f32.gmra.mxu0 %v1071
    %v1153 = vpop.f32.mrf.mxu0
    %v1154 = vadd.f32 %v1134, %v1153
    %1155 = vmatmul.f32.gmra.mxu0 %v1072
    %v1156 = vpop.f32.mrf.mxu0
    %v1157 = vadd.f32 %v1134, %v1156
    %1158 = vdwg.mxu0
    %v1159 = vmul.f32 %v1154, 0.5
    %v1160 = vmul.f32 %v1157, 0.5
    %v1161 = vmul.f32 %v1159, 1.442695
    %v1162 = vpow.pop %v1161
    %v1163 = vmul.f32 %v1160, 1.442695
    %v1164 = vpow.pop %v1163
    %v1165 = vmul.f32 %v335, %v1162
    %v1166 = vmul.f32 %v336, %v1164
    %v1167 = vadd.f32 %v1111, %v1165
    %v1168 = vadd.f32 %v1114, %v1166
    %v1169 = vld [vmem:[#allocation6] sm:$0xff]
    %v1170 = vld [vmem:[#allocation7] sm:$0xff]
    %v1171 = vld [vmem:[#allocation21] sm:$0xff]
    %v1172 = vld [vmem:[#allocation21 + $0x8] sm:$0xff]
    %v1173 = vld [vmem:[#allocation21 + $0x10] sm:$0xff]
    %v1174 = vld [vmem:[#allocation21 + $0x18] sm:$0xff]
    %v1175 = vld [vmem:[#allocation21 + $0x20] sm:$0xff]
    %v1176 = vld [vmem:[#allocation21 + $0x28] sm:$0xff]
    %v1177 = vld [vmem:[#allocation21 + $0x30] sm:$0xff]
    %v1178 = vld [vmem:[#allocation21 + $0x38] sm:$0xff]
    %v1179 = vld [vmem:[#allocation21 + $0x40] sm:$0xff]
    %v1180 = vld [vmem:[#allocation21 + $0x48] sm:$0xff]
    %v1181 = vld [vmem:[#allocation21 + $0x50] sm:$0xff]
    %v1182 = vld [vmem:[#allocation21 + $0x58] sm:$0xff]
    %v1183 = vld [vmem:[#allocation21 + $0x60] sm:$0xff]
    %v1184 = vld [vmem:[#allocation21 + $0x68] sm:$0xff]
    %v1185 = vld [vmem:[#allocation21 + $0x70] sm:$0xff]
    %v1186 = vld [vmem:[#allocation21 + $0x78] sm:$0xff]
    %v1187 = vld [vmem:[#allocation21 + $0x80] sm:$0xff]
    %v1188 = vld [vmem:[#allocation21 + $0x88] sm:$0xff]
    %v1189 = vld [vmem:[#allocation21 + $0x90] sm:$0xff]
    %v1190 = vld [vmem:[#allocation21 + $0x98] sm:$0xff]
    %v1191 = vld [vmem:[#allocation21 + $0xa0] sm:$0xff]
    %v1192 = vld [vmem:[#allocation21 + $0xa8] sm:$0xff]
    %v1193 = vld [vmem:[#allocation21 + $0xb0] sm:$0xff]
    %v1194 = vld [vmem:[#allocation21 + $0xb8] sm:$0xff]
    %v1195 = vld [vmem:[#allocation21 + $0xc0] sm:$0xff]
    %v1196 = vld [vmem:[#allocation21 + $0xc8] sm:$0xff]
    %v1197 = vld [vmem:[#allocation21 + $0xd0] sm:$0xff]
    %v1198 = vld [vmem:[#allocation21 + $0xd8] sm:$0xff]
    %v1199 = vld [vmem:[#allocation21 + $0xe0] sm:$0xff]
    %v1200 = vld [vmem:[#allocation21 + $0xe8] sm:$0xff]
    %v1201 = vld [vmem:[#allocation21 + $0xf0] sm:$0xff]
    %v1202 = vld [vmem:[#allocation21 + $0xf8] sm:$0xff]
    %v1203 = vld [vmem:[#allocation21 + $0x100] sm:$0xff]
    %v1204 = vld [vmem:[#allocation21 + $0x108] sm:$0xff]
    %v1205 = vld [vmem:[#allocation21 + $0x110] sm:$0xff]
    %v1206 = vld [vmem:[#allocation21 + $0x118] sm:$0xff]
    %v1207 = vld [vmem:[#allocation21 + $0x120] sm:$0xff]
    %v1208 = vld [vmem:[#allocation21 + $0x128] sm:$0xff]
    %v1209 = vld [vmem:[#allocation21 + $0x130] sm:$0xff]
    %v1210 = vld [vmem:[#allocation21 + $0x138] sm:$0xff]
    %v1211 = vld [vmem:[#allocation21 + $0x140] sm:$0xff]
    %v1212 = vld [vmem:[#allocation21 + $0x148] sm:$0xff]
    %v1213 = vld [vmem:[#allocation21 + $0x150] sm:$0xff]
    %v1214 = vld [vmem:[#allocation21 + $0x158] sm:$0xff]
    %v1215 = vld [vmem:[#allocation21 + $0x160] sm:$0xff]
    %v1216 = vld [vmem:[#allocation21 + $0x168] sm:$0xff]
    %v1217 = vld [vmem:[#allocation21 + $0x170] sm:$0xff]
    %v1218 = vld [vmem:[#allocation21 + $0x178] sm:$0xff]
    %v1219 = vld [vmem:[#allocation21 + $0x180] sm:$0xff]
    %v1220 = vld [vmem:[#allocation21 + $0x188] sm:$0xff]
    %v1221 = vld [vmem:[#allocation21 + $0x190] sm:$0xff]
    %v1222 = vld [vmem:[#allocation21 + $0x198] sm:$0xff]
    %v1223 = vld [vmem:[#allocation21 + $0x1a0] sm:$0xff]
    %v1224 = vld [vmem:[#allocation21 + $0x1a8] sm:$0xff]
    %v1225 = vld [vmem:[#allocation21 + $0x1b0] sm:$0xff]
    %v1226 = vld [vmem:[#allocation21 + $0x1b8] sm:$0xff]
    %v1227 = vld [vmem:[#allocation21 + $0x1c0] sm:$0xff]
    %v1228 = vld [vmem:[#allocation21 + $0x1c8] sm:$0xff]
    %v1229 = vld [vmem:[#allocation21 + $0x1d0] sm:$0xff]
    %v1230 = vld [vmem:[#allocation21 + $0x1d8] sm:$0xff]
    %v1231 = vld [vmem:[#allocation21 + $0x1e0] sm:$0xff]
    %v1232 = vld [vmem:[#allocation21 + $0x1e8] sm:$0xff]
    %v1233 = vld [vmem:[#allocation21 + $0x1f0] sm:$0xff]
    %v1234 = vld [vmem:[#allocation21 + $0x1f8] sm:$0xff]
    %v1235 = vld [vmem:[%s15] sm:$0xf]
    %v1237 = vperm.slane %v1235, 0
    %v1238 = vperm.slane %v1235, 1
    %v1239 = vperm.slane %v1235, 2
    %v1240 = vperm.slane %v1235, 3
    %1245 = vmatpush.msra.mxu0 %v1231
    %1246 = vmatpush.msra.mxu0 %v1227
    %1247 = vmatpush.msra.mxu0 %v1223
    %1248 = vmatpush.msra.mxu0 %v1219
    %1249 = vmatpush.msra.mxu0 %v1215
    %1250 = vmatpush.msra.mxu0 %v1211
    %1251 = vmatpush.msra.mxu0 %v1207
    %1252 = vmatpush.msra.mxu0 %v1203
    %1253 = vmatpush.msra.mxu0 %v1199
    %1254 = vmatpush.msra.mxu0 %v1195
    %1255 = vmatpush.msra.mxu0 %v1191
    %1256 = vmatpush.msra.mxu0 %v1187
    %1257 = vmatpush.msra.mxu0 %v1183
    %1258 = vmatpush.msra.mxu0 %v1179
    %1259 = vmatpush.msra.mxu0 %v1175
    %1260 = vmatpush.msra.mxu0 %v1171
    %1261 = vmatmul.f32.gmra.mxu0 %v1169
    %v1262 = vpop.f32.mrf.mxu0
    %v1263 = vadd.f32 %v1237, %v1262
    %1264 = vdwg.mxu0
    %1265 = vmatpush.msra.mxu0 %v1232
    %1266 = vmatpush.msra.mxu0 %v1228
    %1267 = vmatpush.msra.mxu0 %v1224
    %1268 = vmatpush.msra.mxu0 %v1220
    %1269 = vmatpush.msra.mxu0 %v1216
    %1270 = vmatpush.msra.mxu0 %v1212
    %1271 = vmatpush.msra.mxu0 %v1208
    %1272 = vmatpush.msra.mxu0 %v1204
    %1273 = vmatpush.msra.mxu0 %v1200
    %1274 = vmatpush.msra.mxu0 %v1196
    %1275 = vmatpush.msra.mxu0 %v1192
    %1276 = vmatpush.msra.mxu0 %v1188
    %1277 = vmatpush.msra.mxu0 %v1184
    %1278 = vmatpush.msra.mxu0 %v1180
    %1279 = vmatpush.msra.mxu0 %v1176
    %1280 = vmatpush.msra.mxu0 %v1172
    %1281 = vmatmul.f32.gmra.mxu0 %v1169
    %v1282 = vpop.f32.mrf.mxu0
    %v1283 = vadd.f32 %v1238, %v1282
    %1284 = vdwg.mxu0
    %1285 = vmatpush.msra.mxu0 %v1233
    %1286 = vmatpush.msra.mxu0 %v1229
    %1287 = vmatpush.msra.mxu0 %v1225
    %1288 = vmatpush.msra.mxu0 %v1221
    %1289 = vmatpush.msra.mxu0 %v1217
    %1290 = vmatpush.msra.mxu0 %v1213
    %1291 = vmatpush.msra.mxu0 %v1209
    %1292 = vmatpush.msra.mxu0 %v1205
    %1293 = vmatpush.msra.mxu0 %v1201
    %1294 = vmatpush.msra.mxu0 %v1197
    %1295 = vmatpush.msra.mxu0 %v1193
    %1296 = vmatpush.msra.mxu0 %v1189
    %1297 = vmatpush.msra.mxu0 %v1185
    %1298 = vmatpush.msra.mxu0 %v1181
    %1299 = vmatpush.msra.mxu0 %v1177
    %1300 = vmatpush.msra.mxu0 %v1173
    %1301 = vmatmul.f32.gmra.mxu0 %v1169
    %v1302 = vpop.f32.mrf.mxu0
    %v1303 = vadd.f32 %v1239, %v1302
    %1304 = vdwg.mxu0
    %1305 = vmatpush.msra.mxu0 %v1234
    %1306 = vmatpush.msra.mxu0 %v1230
    %1307 = vmatpush.msra.mxu0 %v1226
    %1308 = vmatpush.msra.mxu0 %v1222
    %1309 = vmatpush.msra.mxu0 %v1218
    %1310 = vmatpush.msra.mxu0 %v1214
    %1311 = vmatpush.msra.mxu0 %v1210
    %1312 = vmatpush.msra.mxu0 %v1206
    %1313 = vmatpush.msra.mxu0 %v1202
    %1314 = vmatpush.msra.mxu0 %v1198
    %1315 = vmatpush.msra.mxu0 %v1194
    %1316 = vmatpush.msra.mxu0 %v1190
    %1317 = vmatpush.msra.mxu0 %v1186
    %1318 = vmatpush.msra.mxu0 %v1182
    %1319 = vmatpush.msra.mxu0 %v1178
    %1320 = vmatpush.msra.mxu0 %v1174
    %1321 = vmatmul.f32.gmra.mxu0 %v1169
    %v1322 = vpop.f32.mrf.mxu0
    %v1323 = vadd.f32 %v1240, %v1322
    %1324 = vdwg.mxu0
    %v1325 = vmax.f32 %v1263, 0.0
    %v1326 = vmax.f32 %v1283, 0.0
    %v1327 = vmax.f32 %v1303, 0.0
    %v1328 = vmax.f32 %v1323, 0.0
    %v1329 = vld [vmem:[#allocation22] sm:$0xff]
    %v1330 = vld [vmem:[#allocation22 + $0x8] sm:$0xff]
    %v1331 = vld [vmem:[#allocation22 + $0x10] sm:$0xff]
    %v1332 = vld [vmem:[#allocation22 + $0x18] sm:$0xff]
    %v1333 = vld [vmem:[#allocation22 + $0x20] sm:$0xff]
    %v1334 = vld [vmem:[#allocation22 + $0x28] sm:$0xff]
    %v1335 = vld [vmem:[#allocation22 + $0x30] sm:$0xff]
    %v1336 = vld [vmem:[#allocation22 + $0x38] sm:$0xff]
    %v1337 = vld [vmem:[#allocation22 + $0x40] sm:$0xff]
    %v1338 = vld [vmem:[#allocation22 + $0x48] sm:$0xff]
    %v1339 = vld [vmem:[#allocation22 + $0x50] sm:$0xff]
    %v1340 = vld [vmem:[#allocation22 + $0x58] sm:$0xff]
    %v1341 = vld [vmem:[#allocation22 + $0x60] sm:$0xff]
    %v1342 = vld [vmem:[#allocation22 + $0x68] sm:$0xff]
    %v1343 = vld [vmem:[#allocation22 + $0x70] sm:$0xff]
    %v1344 = vld [vmem:[#allocation22 + $0x78] sm:$0xff]
    %v1345 = vld [vmem:[#allocation22 + $0x80] sm:$0xff]
    %v1346 = vld [vmem:[#allocation22 + $0x88] sm:$0xff]
    %v1347 = vld [vmem:[#allocation22 + $0x90] sm:$0xff]
    %v1348 = vld [vmem:[#allocation22 + $0x98] sm:$0xff]
    %v1349 = vld [vmem:[#allocation22 + $0xa0] sm:$0xff]
    %v1350 = vld [vmem:[#allocation22 + $0xa8] sm:$0xff]
    %v1351 = vld [vmem:[#allocation22 + $0xb0] sm:$0xff]
    %v1352 = vld [vmem:[#allocation22 + $0xb8] sm:$0xff]
    %v1353 = vld [vmem:[#allocation22 + $0xc0] sm:$0xff]
    %v1354 = vld [vmem:[#allocation22 + $0xc8] sm:$0xff]
    %v1355 = vld [vmem:[#allocation22 + $0xd0] sm:$0xff]
    %v1356 = vld [vmem:[#allocation22 + $0xd8] sm:$0xff]
    %v1357 = vld [vmem:[#allocation22 + $0xe0] sm:$0xff]
    %v1358 = vld [vmem:[#allocation22 + $0xe8] sm:$0xff]
    %v1359 = vld [vmem:[#allocation22 + $0xf0] sm:$0xff]
    %v1360 = vld [vmem:[#allocation22 + $0xf8] sm:$0xff]
    %v1361 = vld [vmem:[#allocation22 + $0x100] sm:$0xff]
    %v1362 = vld [vmem:[#allocation22 + $0x108] sm:$0xff]
    %v1363 = vld [vmem:[#allocation22 + $0x110] sm:$0xff]
    %v1364 = vld [vmem:[#allocation22 + $0x118] sm:$0xff]
    %v1365 = vld [vmem:[#allocation22 + $0x120] sm:$0xff]
    %v1366 = vld [vmem:[#allocation22 + $0x128] sm:$0xff]
    %v1367 = vld [vmem:[#allocation22 + $0x130] sm:$0xff]
    %v1368 = vld [vmem:[#allocation22 + $0x138] sm:$0xff]
    %v1369 = vld [vmem:[#allocation22 + $0x140] sm:$0xff]
    %v1370 = vld [vmem:[#allocation22 + $0x148] sm:$0xff]
    %v1371 = vld [vmem:[#allocation22 + $0x150] sm:$0xff]
    %v1372 = vld [vmem:[#allocation22 + $0x158] sm:$0xff]
    %v1373 = vld [vmem:[#allocation22 + $0x160] sm:$0xff]
    %v1374 = vld [vmem:[#allocation22 + $0x168] sm:$0xff]
    %v1375 = vld [vmem:[#allocation22 + $0x170] sm:$0xff]
    %v1376 = vld [vmem:[#allocation22 + $0x178] sm:$0xff]
    %v1377 = vld [vmem:[#allocation22 + $0x180] sm:$0xff]
    %v1378 = vld [vmem:[#allocation22 + $0x188] sm:$0xff]
    %v1379 = vld [vmem:[#allocation22 + $0x190] sm:$0xff]
    %v1380 = vld [vmem:[#allocation22 + $0x198] sm:$0xff]
    %v1381 = vld [vmem:[#allocation22 + $0x1a0] sm:$0xff]
    %v1382 = vld [vmem:[#allocation22 + $0x1a8] sm:$0xff]
    %v1383 = vld [vmem:[#allocation22 + $0x1b0] sm:$0xff]
    %v1384 = vld [vmem:[#allocation22 + $0x1b8] sm:$0xff]
    %v1385 = vld [vmem:[#allocation22 + $0x1c0] sm:$0xff]
    %v1386 = vld [vmem:[#allocation22 + $0x1c8] sm:$0xff]
    %v1387 = vld [vmem:[#allocation22 + $0x1d0] sm:$0xff]
    %v1388 = vld [vmem:[#allocation22 + $0x1d8] sm:$0xff]
    %v1389 = vld [vmem:[#allocation22 + $0x1e0] sm:$0xff]
    %v1390 = vld [vmem:[#allocation22 + $0x1e8] sm:$0xff]
    %v1391 = vld [vmem:[#allocation22 + $0x1f0] sm:$0xff]
    %v1392 = vld [vmem:[#allocation22 + $0x1f8] sm:$0xff]
    %v1393 = vld [vmem:[#allocation22 + $0x200] sm:$0xff]
    %v1394 = vld [vmem:[#allocation22 + $0x208] sm:$0xff]
    %v1395 = vld [vmem:[#allocation22 + $0x210] sm:$0xff]
    %v1396 = vld [vmem:[#allocation22 + $0x218] sm:$0xff]
    %v1397 = vld [vmem:[#allocation22 + $0x220] sm:$0xff]
    %v1398 = vld [vmem:[#allocation22 + $0x228] sm:$0xff]
    %v1399 = vld [vmem:[#allocation22 + $0x230] sm:$0xff]
    %v1400 = vld [vmem:[#allocation22 + $0x238] sm:$0xff]
    %v1401 = vld [vmem:[#allocation22 + $0x240] sm:$0xff]
    %v1402 = vld [vmem:[#allocation22 + $0x248] sm:$0xff]
    %v1403 = vld [vmem:[#allocation22 + $0x250] sm:$0xff]
    %v1404 = vld [vmem:[#allocation22 + $0x258] sm:$0xff]
    %v1405 = vld [vmem:[#allocation22 + $0x260] sm:$0xff]
    %v1406 = vld [vmem:[#allocation22 + $0x268] sm:$0xff]
    %v1407 = vld [vmem:[#allocation22 + $0x270] sm:$0xff]
    %v1408 = vld [vmem:[#allocation22 + $0x278] sm:$0xff]
    %v1409 = vld [vmem:[#allocation22 + $0x280] sm:$0xff]
    %v1410 = vld [vmem:[#allocation22 + $0x288] sm:$0xff]
    %v1411 = vld [vmem:[#allocation22 + $0x290] sm:$0xff]
    %v1412 = vld [vmem:[#allocation22 + $0x298] sm:$0xff]
    %v1413 = vld [vmem:[#allocation22 + $0x2a0] sm:$0xff]
    %v1414 = vld [vmem:[#allocation22 + $0x2a8] sm:$0xff]
    %v1415 = vld [vmem:[#allocation22 + $0x2b0] sm:$0xff]
    %v1416 = vld [vmem:[#allocation22 + $0x2b8] sm:$0xff]
    %v1417 = vld [vmem:[#allocation22 + $0x2c0] sm:$0xff]
    %v1418 = vld [vmem:[#allocation22 + $0x2c8] sm:$0xff]
    %v1419 = vld [vmem:[#allocation22 + $0x2d0] sm:$0xff]
    %v1420 = vld [vmem:[#allocation22 + $0x2d8] sm:$0xff]
    %v1421 = vld [vmem:[#allocation22 + $0x2e0] sm:$0xff]
    %v1422 = vld [vmem:[#allocation22 + $0x2e8] sm:$0xff]
    %v1423 = vld [vmem:[#allocation22 + $0x2f0] sm:$0xff]
    %v1424 = vld [vmem:[#allocation22 + $0x2f8] sm:$0xff]
    %v1425 = vld [vmem:[#allocation22 + $0x300] sm:$0xff]
    %v1426 = vld [vmem:[#allocation22 + $0x308] sm:$0xff]
    %v1427 = vld [vmem:[#allocation22 + $0x310] sm:$0xff]
    %v1428 = vld [vmem:[#allocation22 + $0x318] sm:$0xff]
    %v1429 = vld [vmem:[#allocation22 + $0x320] sm:$0xff]
    %v1430 = vld [vmem:[#allocation22 + $0x328] sm:$0xff]
    %v1431 = vld [vmem:[#allocation22 + $0x330] sm:$0xff]
    %v1432 = vld [vmem:[#allocation22 + $0x338] sm:$0xff]
    %v1433 = vld [vmem:[#allocation22 + $0x340] sm:$0xff]
    %v1434 = vld [vmem:[#allocation22 + $0x348] sm:$0xff]
    %v1435 = vld [vmem:[#allocation22 + $0x350] sm:$0xff]
    %v1436 = vld [vmem:[#allocation22 + $0x358] sm:$0xff]
    %v1437 = vld [vmem:[#allocation22 + $0x360] sm:$0xff]
    %v1438 = vld [vmem:[#allocation22 + $0x368] sm:$0xff]
    %v1439 = vld [vmem:[#allocation22 + $0x370] sm:$0xff]
    %v1440 = vld [vmem:[#allocation22 + $0x378] sm:$0xff]
    %v1441 = vld [vmem:[#allocation22 + $0x380] sm:$0xff]
    %v1442 = vld [vmem:[#allocation22 + $0x388] sm:$0xff]
    %v1443 = vld [vmem:[#allocation22 + $0x390] sm:$0xff]
    %v1444 = vld [vmem:[#allocation22 + $0x398] sm:$0xff]
    %v1445 = vld [vmem:[#allocation22 + $0x3a0] sm:$0xff]
    %v1446 = vld [vmem:[#allocation22 + $0x3a8] sm:$0xff]
    %v1447 = vld [vmem:[#allocation22 + $0x3b0] sm:$0xff]
    %v1448 = vld [vmem:[#allocation22 + $0x3b8] sm:$0xff]
    %v1449 = vld [vmem:[#allocation22 + $0x3c0] sm:$0xff]
    %v1450 = vld [vmem:[#allocation22 + $0x3c8] sm:$0xff]
    %v1451 = vld [vmem:[#allocation22 + $0x3d0] sm:$0xff]
    %v1452 = vld [vmem:[#allocation22 + $0x3d8] sm:$0xff]
    %v1453 = vld [vmem:[#allocation22 + $0x3e0] sm:$0xff]
    %v1454 = vld [vmem:[#allocation22 + $0x3e8] sm:$0xff]
    %v1455 = vld [vmem:[#allocation22 + $0x3f0] sm:$0xff]
    %v1456 = vld [vmem:[#allocation22 + $0x3f8] sm:$0xff]
    %v1457 = vld [vmem:[%s17] sm:$0x3]
    %v1459 = vperm.slane %v1457, 0
    %v1460 = vperm.slane %v1457, 1
    %1463 = vmatpush.msra.mxu0 %v1359
    %1464 = vmatpush.msra.mxu0 %v1357
    %1465 = vmatpush.msra.mxu0 %v1355
    %1466 = vmatpush.msra.mxu0 %v1353
    %1467 = vmatpush.msra.mxu0 %v1351
    %1468 = vmatpush.msra.mxu0 %v1349
    %1469 = vmatpush.msra.mxu0 %v1347
    %1470 = vmatpush.msra.mxu0 %v1345
    %1471 = vmatpush.msra.mxu0 %v1343
    %1472 = vmatpush.msra.mxu0 %v1341
    %1473 = vmatpush.msra.mxu0 %v1339
    %1474 = vmatpush.msra.mxu0 %v1337
    %1475 = vmatpush.msra.mxu0 %v1335
    %1476 = vmatpush.msra.mxu0 %v1333
    %1477 = vmatpush.msra.mxu0 %v1331
    %1478 = vmatpush.msra.mxu0 %v1329
    %1479 = vmatmul.f32.gmra.mxu0 %v1325
    %v1480 = vpop.f32.mrf.mxu0
    %v1481 = vadd.f32 %v1459, %v1480
    %1482 = vdwg.mxu0
    %1483 = vmatpush.msra.mxu0 %v1391
    %1484 = vmatpush.msra.mxu0 %v1389
    %1485 = vmatpush.msra.mxu0 %v1387
    %1486 = vmatpush.msra.mxu0 %v1385
    %1487 = vmatpush.msra.mxu0 %v1383
    %1488 = vmatpush.msra.mxu0 %v1381
    %1489 = vmatpush.msra.mxu0 %v1379
    %1490 = vmatpush.msra.mxu0 %v1377
    %1491 = vmatpush.msra.mxu0 %v1375
    %1492 = vmatpush.msra.mxu0 %v1373
    %1493 = vmatpush.msra.mxu0 %v1371
    %1494 = vmatpush.msra.mxu0 %v1369
    %1495 = vmatpush.msra.mxu0 %v1367
    %1496 = vmatpush.msra.mxu0 %v1365
    %1497 = vmatpush.msra.mxu0 %v1363
    %1498 = vmatpush.msra.mxu0 %v1361
    %1499 = vmatmul.f32.gmra.mxu0 %v1326
    %v1500 = vpop.f32.mrf.mxu0
    %v1501 = vadd.f32 %v1481, %v1500
    %1502 = vdwg.mxu0
    %1503 = vmatpush.msra.mxu0 %v1423
    %1504 = vmatpush.msra.mxu0 %v1421
    %1505 = vmatpush.msra.mxu0 %v1419
    %1506 = vmatpush.msra.mxu0 %v1417
    %1507 = vmatpush.msra.mxu0 %v1415
    %1508 = vmatpush.msra.mxu0 %v1413
    %1509 = vmatpush.msra.mxu0 %v1411
    %1510 = vmatpush.msra.mxu0 %v1409
    %1511 = vmatpush.msra.mxu0 %v1407
    %1512 = vmatpush.msra.mxu0 %v1405
    %1513 = vmatpush.msra.mxu0 %v1403
    %1514 = vmatpush.msra.mxu0 %v1401
    %1515 = vmatpush.msra.mxu0 %v1399
    %1516 = vmatpush.msra.mxu0 %v1397
    %1517 = vmatpush.msra.mxu0 %v1395
    %1518 = vmatpush.msra.mxu0 %v1393
    %1519 = vmatmul.f32.gmra.mxu0 %v1327
    %v1520 = vpop.f32.mrf.mxu0
    %v1521 = vadd.f32 %v1501, %v1520
    %1522 = vdwg.mxu0
    %1523 = vmatpush.msra.mxu0 %v1455
    %1524 = vmatpush.msra.mxu0 %v1453
    %1525 = vmatpush.msra.mxu0 %v1451
    %1526 = vmatpush.msra.mxu0 %v1449
    %1527 = vmatpush.msra.mxu0 %v1447
    %1528 = vmatpush.msra.mxu0 %v1445
    %1529 = vmatpush.msra.mxu0 %v1443
    %1530 = vmatpush.msra.mxu0 %v1441
    %1531 = vmatpush.msra.mxu0 %v1439
    %1532 = vmatpush.msra.mxu0 %v1437
    %1533 = vmatpush.msra.mxu0 %v1435
    %1534 = vmatpush.msra.mxu0 %v1433
    %1535 = vmatpush.msra.mxu0 %v1431
    %1536 = vmatpush.msra.mxu0 %v1429
    %1537 = vmatpush.msra.mxu0 %v1427
    %1538 = vmatpush.msra.mxu0 %v1425
    %1539 = vmatmul.f32.gmra.mxu0 %v1328
    %v1540 = vpop.f32.mrf.mxu0
    %v1541 = vadd.f32 %v1521, %v1540
    %1542 = vdwg.mxu0
    %1543 = vmatpush.msra.mxu0 %v1360
    %1544 = vmatpush.msra.mxu0 %v1358
    %1545 = vmatpush.msra.mxu0 %v1356
    %1546 = vmatpush.msra.mxu0 %v1354
    %1547 = vmatpush.msra.mxu0 %v1352
    %1548 = vmatpush.msra.mxu0 %v1350
    %1549 = vmatpush.msra.mxu0 %v1348
    %1550 = vmatpush.msra.mxu0 %v1346
    %1551 = vmatpush.msra.mxu0 %v1344
    %1552 = vmatpush.msra.mxu0 %v1342
    %1553 = vmatpush.msra.mxu0 %v1340
    %1554 = vmatpush.msra.mxu0 %v1338
    %1555 = vmatpush.msra.mxu0 %v1336
    %1556 = vmatpush.msra.mxu0 %v1334
    %1557 = vmatpush.msra.mxu0 %v1332
    %1558 = vmatpush.msra.mxu0 %v1330
    %1559 = vmatmul.f32.gmra.mxu0 %v1325
    %v1560 = vpop.f32.mrf.mxu0
    %v1561 = vadd.f32 %v1460, %v1560
    %1562 = vdwg.mxu0
    %1563 = vmatpush.msra.mxu0 %v1392
    %1564 = vmatpush.msra.mxu0 %v1390
    %1565 = vmatpush.msra.mxu0 %v1388
    %1566 = vmatpush.msra.mxu0 %v1386
    %1567 = vmatpush.msra.mxu0 %v1384
    %1568 = vmatpush.msra.mxu0 %v1382
    %1569 = vmatpush.msra.mxu0 %v1380
    %1570 = vmatpush.msra.mxu0 %v1378
    %1571 = vmatpush.msra.mxu0 %v1376
    %1572 = vmatpush.msra.mxu0 %v1374
    %1573 = vmatpush.msra.mxu0 %v1372
    %1574 = vmatpush.msra.mxu0 %v1370
    %1575 = vmatpush.msra.mxu0 %v1368
    %1576 = vmatpush.msra.mxu0 %v1366
    %1577 = vmatpush.msra.mxu0 %v1364
    %1578 = vmatpush.msra.mxu0 %v1362
    %1579 = vmatmul.f32.gmra.mxu0 %v1326
    %v1580 = vpop.f32.mrf.mxu0
    %v1581 = vadd.f32 %v1561, %v1580
    %1582 = vdwg.mxu0
    %1583 = vmatpush.msra.mxu0 %v1424
    %1584 = vmatpush.msra.mxu0 %v1422
    %1585 = vmatpush.msra.mxu0 %v1420
    %1586 = vmatpush.msra.mxu0 %v1418
    %1587 = vmatpush.msra.mxu0 %v1416
    %1588 = vmatpush.msra.mxu0 %v1414
    %1589 = vmatpush.msra.mxu0 %v1412
    %1590 = vmatpush.msra.mxu0 %v1410
    %1591 = vmatpush.msra.mxu0 %v1408
    %1592 = vmatpush.msra.mxu0 %v1406
    %1593 = vmatpush.msra.mxu0 %v1404
    %1594 = vmatpush.msra.mxu0 %v1402
    %1595 = vmatpush.msra.mxu0 %v1400
    %1596 = vmatpush.msra.mxu0 %v1398
    %1597 = vmatpush.msra.mxu0 %v1396
    %1598 = vmatpush.msra.mxu0 %v1394
    %1599 = vmatmul.f32.gmra.mxu0 %v1327
    %v1600 = vpop.f32.mrf.mxu0
    %v1601 = vadd.f32 %v1581, %v1600
    %1602 = vdwg.mxu0
    %1603 = vmatpush.msra.mxu0 %v1456
    %1604 = vmatpush.msra.mxu0 %v1454
    %1605 = vmatpush.msra.mxu0 %v1452
    %1606 = vmatpush.msra.mxu0 %v1450
    %1607 = vmatpush.msra.mxu0 %v1448
    %1608 = vmatpush.msra.mxu0 %v1446
    %1609 = vmatpush.msra.mxu0 %v1444
    %1610 = vmatpush.msra.mxu0 %v1442
    %1611 = vmatpush.msra.mxu0 %v1440
    %1612 = vmatpush.msra.mxu0 %v1438
    %1613 = vmatpush.msra.mxu0 %v1436
    %1614 = vmatpush.msra.mxu0 %v1434
    %1615 = vmatpush.msra.mxu0 %v1432
    %1616 = vmatpush.msra.mxu0 %v1430
    %1617 = vmatpush.msra.mxu0 %v1428
    %1618 = vmatpush.msra.mxu0 %v1426
    %1619 = vmatmul.f32.gmra.mxu0 %v1328
    %v1620 = vpop.f32.mrf.mxu0
    %v1621 = vadd.f32 %v1601, %v1620
    %1622 = vdwg.mxu0
    %v1623 = vmax.f32 %v1541, 0.0
    %v1624 = vmax.f32 %v1621, 0.0
    %v1625 = vld [vmem:[#allocation24] sm:$0xff]
    %v1626 = vld [vmem:[#allocation24 + $0x8] sm:$0xff]
    %v1627 = vld [vmem:[#allocation24 + $0x10] sm:$0xff]
    %v1628 = vld [vmem:[#allocation24 + $0x18] sm:$0xff]
    %v1629 = vld [vmem:[#allocation24 + $0x20] sm:$0xff]
    %v1630 = vld [vmem:[#allocation24 + $0x28] sm:$0xff]
    %v1631 = vld [vmem:[#allocation24 + $0x30] sm:$0xff]
    %v1632 = vld [vmem:[#allocation24 + $0x38] sm:$0xff]
    %v1633 = vld [vmem:[#allocation24 + $0x40] sm:$0xff]
    %v1634 = vld [vmem:[#allocation24 + $0x48] sm:$0xff]
    %v1635 = vld [vmem:[#allocation24 + $0x50] sm:$0xff]
    %v1636 = vld [vmem:[#allocation24 + $0x58] sm:$0xff]
    %v1637 = vld [vmem:[#allocation24 + $0x60] sm:$0xff]
    %v1638 = vld [vmem:[#allocation24 + $0x68] sm:$0xff]
    %v1639 = vld [vmem:[#allocation24 + $0x70] sm:$0xff]
    %v1640 = vld [vmem:[#allocation24 + $0x78] sm:$0xff]
    %v1641 = vld [vmem:[#allocation24 + $0x80] sm:$0xff]
    %v1642 = vld [vmem:[#allocation24 + $0x88] sm:$0xff]
    %v1643 = vld [vmem:[#allocation24 + $0x90] sm:$0xff]
    %v1644 = vld [vmem:[#allocation24 + $0x98] sm:$0xff]
    %v1645 = vld [vmem:[#allocation24 + $0xa0] sm:$0xff]
    %v1646 = vld [vmem:[#allocation24 + $0xa8] sm:$0xff]
    %v1647 = vld [vmem:[#allocation24 + $0xb0] sm:$0xff]
    %v1648 = vld [vmem:[#allocation24 + $0xb8] sm:$0xff]
    %v1649 = vld [vmem:[#allocation24 + $0xc0] sm:$0xff]
    %v1650 = vld [vmem:[#allocation24 + $0xc8] sm:$0xff]
    %v1651 = vld [vmem:[#allocation24 + $0xd0] sm:$0xff]
    %v1652 = vld [vmem:[#allocation24 + $0xd8] sm:$0xff]
    %v1653 = vld [vmem:[#allocation24 + $0xe0] sm:$0xff]
    %v1654 = vld [vmem:[#allocation24 + $0xe8] sm:$0xff]
    %v1655 = vld [vmem:[#allocation24 + $0xf0] sm:$0xff]
    %v1656 = vld [vmem:[#allocation24 + $0xf8] sm:$0xff]
    %v1657 = vld [vmem:[%s19] sm:$0x1]
    %v1659 = vperm.slane %v1657, 0
    %1661 = vmatpush.msra.mxu0 %v1640
    %1662 = vmatpush.msra.mxu0 %v1639
    %1663 = vmatpush.msra.mxu0 %v1638
    %1664 = vmatpush.msra.mxu0 %v1637
    %1665 = vmatpush.msra.mxu0 %v1636
    %1666 = vmatpush.msra.mxu0 %v1635
    %1667 = vmatpush.msra.mxu0 %v1634
    %1668 = vmatpush.msra.mxu0 %v1633
    %1669 = vmatpush.msra.mxu0 %v1632
    %1670 = vmatpush.msra.mxu0 %v1631
    %1671 = vmatpush.msra.mxu0 %v1630
    %1672 = vmatpush.msra.mxu0 %v1629
    %1673 = vmatpush.msra.mxu0 %v1628
    %1674 = vmatpush.msra.mxu0 %v1627
    %1675 = vmatpush.msra.mxu0 %v1626
    %1676 = vmatpush.msra.mxu0 %v1625
    %1677 = vmatmul.f32.gmra.mxu0 %v1623
    %v1678 = vpop.f32.mrf.mxu0
    %v1679 = vadd.f32 %v1659, %v1678
    %1680 = vdwg.mxu0
    %1681 = vmatpush.msra.mxu0 %v1656
    %1682 = vmatpush.msra.mxu0 %v1655
    %1683 = vmatpush.msra.mxu0 %v1654
    %1684 = vmatpush.msra.mxu0 %v1653
    %1685 = vmatpush.msra.mxu0 %v1652
    %1686 = vmatpush.msra.mxu0 %v1651
    %1687 = vmatpush.msra.mxu0 %v1650
    %1688 = vmatpush.msra.mxu0 %v1649
    %1689 = vmatpush.msra.mxu0 %v1648
    %1690 = vmatpush.msra.mxu0 %v1647
    %1691 = vmatpush.msra.mxu0 %v1646
    %1692 = vmatpush.msra.mxu0 %v1645
    %1693 = vmatpush.msra.mxu0 %v1644
    %1694 = vmatpush.msra.mxu0 %v1643
    %1695 = vmatpush.msra.mxu0 %v1642
    %1696 = vmatpush.msra.mxu0 %v1641
    %1697 = vmatmul.f32.gmra.mxu0 %v1624
    %v1698 = vpop.f32.mrf.mxu0
    %v1699 = vadd.f32 %v1679, %v1698
    %1700 = vdwg.mxu0
    %v1701 = vmax.f32 %v1699, 0.0
    %v1702 = vld [vmem:[#allocation25] sm:$0xff]
    %v1703 = vld [vmem:[#allocation25 + $0x8] sm:$0xff]
    %v1704 = vld [vmem:[#allocation25 + $0x10] sm:$0xff]
    %v1705 = vld [vmem:[#allocation25 + $0x18] sm:$0xff]
    %v1706 = vld [vmem:[#allocation25 + $0x20] sm:$0xff]
    %v1707 = vld [vmem:[#allocation25 + $0x28] sm:$0xff]
    %v1708 = vld [vmem:[#allocation25 + $0x30] sm:$0xff]
    %v1709 = vld [vmem:[#allocation25 + $0x38] sm:$0xff]
    %v1710 = vld [vmem:[#allocation25 + $0x40] sm:$0xff]
    %v1711 = vld [vmem:[#allocation25 + $0x48] sm:$0xff]
    %v1712 = vld [vmem:[#allocation25 + $0x50] sm:$0xff]
    %v1713 = vld [vmem:[#allocation25 + $0x58] sm:$0xff]
    %v1714 = vld [vmem:[#allocation25 + $0x60] sm:$0xff]
    %v1715 = vld [vmem:[#allocation25 + $0x68] sm:$0xff]
    %v1716 = vld [vmem:[#allocation25 + $0x70] sm:$0xff]
    %v1717 = vld [vmem:[#allocation25 + $0x78] sm:$0xff]
    %v1718 = vld [vmem:[%s21] sm:$0x1]
    %v1720 = vperm.slane %v1718, 0
    %1722 = vmatpush.msra.mxu0 %v1717
    %1723 = vmatpush.msra.mxu0 %v1716
    %1724 = vmatpush.msra.mxu0 %v1715
    %1725 = vmatpush.msra.mxu0 %v1714
    %1726 = vmatpush.msra.mxu0 %v1713
    %1727 = vmatpush.msra.mxu0 %v1712
    %1728 = vmatpush.msra.mxu0 %v1711
    %1729 = vmatpush.msra.mxu0 %v1710
    %1730 = vmatpush.msra.mxu0 %v1709
    %1731 = vmatpush.msra.mxu0 %v1708
    %1732 = vmatpush.msra.mxu0 %v1707
    %1733 = vmatpush.msra.mxu0 %v1706
    %1734 = vmatpush.msra.mxu0 %v1705
    %1735 = vmatpush.msra.mxu0 %v1704
    %1736 = vmatpush.msra.mxu0 %v1703
    %1737 = vmatpush.msra.mxu0 %v1702
    %1738 = vmatmul.f32.gmra.mxu0 %v1701
    %v1739 = vpop.f32.mrf.mxu0
    %v1740 = vadd.f32 %v1720, %v1739
    %1741 = vdwg.mxu0
    %v1742 = vld [vmem:[#allocation27] sm:$0xff]
    %v1743 = vld [vmem:[#allocation27 + $0x8] sm:$0xff]
    %v1744 = vld [vmem:[#allocation27 + $0x10] sm:$0xff]
    %v1745 = vld [vmem:[#allocation27 + $0x18] sm:$0xff]
    %v1746 = vld [vmem:[#allocation27 + $0x20] sm:$0xff]
    %v1747 = vld [vmem:[#allocation27 + $0x28] sm:$0xff]
    %v1748 = vld [vmem:[#allocation27 + $0x30] sm:$0xff]
    %v1749 = vld [vmem:[#allocation27 + $0x38] sm:$0xff]
    %v1750 = vld [vmem:[#allocation27 + $0x40] sm:$0xff]
    %v1751 = vld [vmem:[#allocation27 + $0x48] sm:$0xff]
    %v1752 = vld [vmem:[#allocation27 + $0x50] sm:$0xff]
    %v1753 = vld [vmem:[#allocation27 + $0x58] sm:$0xff]
    %v1754 = vld [vmem:[#allocation27 + $0x60] sm:$0xff]
    %v1755 = vld [vmem:[#allocation27 + $0x68] sm:$0xff]
    %v1756 = vld [vmem:[#allocation27 + $0x70] sm:$0xff]
    %v1757 = vld [vmem:[#allocation27 + $0x78] sm:$0xff]
    %v1758 = vld [vmem:[%s23] sm:$0x1]
    %v1760 = vperm.slane %v1758, 0
    %1762 = vmatpush.msra.mxu0 %v1757
    %1763 = vmatpush.msra.mxu0 %v1756
    %1764 = vmatpush.msra.mxu0 %v1755
    %1765 = vmatpush.msra.mxu0 %v1754
    %1766 = vmatpush.msra.mxu0 %v1753
    %1767 = vmatpush.msra.mxu0 %v1752
    %1768 = vmatpush.msra.mxu0 %v1751
    %1769 = vmatpush.msra.mxu0 %v1750
    %1770 = vmatpush.msra.mxu0 %v1749
    %1771 = vmatpush.msra.mxu0 %v1748
    %1772 = vmatpush.msra.mxu0 %v1747
    %1773 = vmatpush.msra.mxu0 %v1746
    %1774 = vmatpush.msra.mxu0 %v1745
    %1775 = vmatpush.msra.mxu0 %v1744
    %1776 = vmatpush.msra.mxu0 %v1743
    %1777 = vmatpush.msra.mxu0 %v1742
    %1778 = vmatmul.f32.gmra.mxu0 %v1701
    %v1779 = vpop.f32.mrf.mxu0
    %v1780 = vadd.f32 %v1760, %v1779
    %1781 = vdwg.mxu0
    %v1782 = vmul.f32 %v1780, 0.5
    %v1783 = vmul.f32 %v1782, 1.442695
    %v1784 = vpow.pop %v1783
    %v1785 = vmul.f32 %v1170, %v1784
    %v1786 = vadd.f32 %v1740, %v1785
    %1787 = vmatpush.xpose.msra.mxu0 0.0
    %1788 = vmatpush.xpose.msra.mxu0 0.0
    %1789 = vmatpush.xpose.msra.mxu0 0.0
    %1790 = vmatpush.xpose.msra.mxu0 0.0
    %1791 = vmatpush.xpose.msra.mxu0 0.0
    %1792 = vmatpush.xpose.msra.mxu0 0.0
    %1793 = vmatpush.xpose.msra.mxu0 0.0
    %1794 = vmatpush.xpose.msra.mxu0 0.0
    %1795 = vmatpush.xpose.msra.mxu0 0.0
    %1796 = vmatpush.xpose.msra.mxu0 0.0
    %1797 = vmatpush.xpose.msra.mxu0 0.0
    %1798 = vmatpush.xpose.msra.mxu0 0.0
    %1799 = vmatpush.xpose.msra.mxu0 0.0
    %1800 = vmatpush.xpose.msra.mxu0 0.0
    %1801 = vmatpush.xpose.msra.mxu0 0.0
    %1802 = vmatpush.xpose.msra.mxu0 %v1786
    %1803 = vmatmul.f32.gmra.mxu0 %v1167
    %v1804 = vpop.f32.mrf.mxu0
    %v1805 = vadd.f32 0.0, %v1804
    %1806 = vmatmul.f32.gmra.mxu0 %v1168
    %v1807 = vpop.f32.mrf.mxu0
    %v1808 = vadd.f32 0.0, %v1807
    %1809 = vdwg.mxu0
    %v1810 = vlaneseq
    %v1811 = vshrl.u32 %v1810, 7
    %v1812 = vadd.s32 %v1811, 8
    %v1813 = vlaneseq
    %v1814 = vand.u32 %v1813, 127
    %vm1815 = vcmp.lt.s32.totalorder %v1811, 16
    %vm1816 = vcmp.lt.s32.totalorder %v1812, 16
    %vm1817 = vcmp.lt.s32.totalorder %v1814, 8
    %vm1818 = vmand %vm1815, %vm1817
    %vm1819 = vmand %vm1816, %vm1817
    %v1820 = vsel %vm1818, %v1805, -inf
    %v1821 = vsel %vm1819, %v1808, -inf
    %vm1822 = vcmask 64512
    %v1823 = vsel %vm1822, %v1820, -inf
    %1824 = vmax.xlane.f32.xlu0 %v1823
    %v1825 = vpop.xlane.xlu0 %1824
    %v1826 = vsel %vm1822, %v1821, -inf
    %1827 = vmax.xlane.f32.xlu0 %v1826
    %v1828 = vpop.xlane.xlu0 %1827
    %v1829 = vmax.f32 %v1825, %v1828
    %v1830 = vrot.slane %v1829, 4
    %v1831 = vmax.f32 %v1829, %v1830
    %v1832 = vrot.slane %v1831, 2
    %v1833 = vmax.f32 %v1831, %v1832
    %v1834 = vrot.slane %v1833, 1
    %v1835 = vmax.f32 %v1833, %v1834
    %v1836 = vsel %vm1818, %v1805, inf
    %v1837 = vsel %vm1819, %v1808, inf
    %v1838 = vsel %vm1822, %v1836, inf
    %1839 = vmin.xlane.f32.xlu0 %v1838
    %v1840 = vpop.xlane.xlu0 %1839
    %v1841 = vsel %vm1822, %v1837, inf
    %1842 = vmin.xlane.f32.xlu0 %v1841
    %v1843 = vpop.xlane.xlu0 %1842
    %v1844 = vmin.f32 %v1840, %v1843
    %v1845 = vrot.slane %v1844, 4
    %v1846 = vmin.f32 %v1844, %v1845
    %v1847 = vrot.slane %v1846, 2
    %v1848 = vmin.f32 %v1846, %v1847
    %v1849 = vrot.slane %v1848, 1
    %v1850 = vmin.f32 %v1848, %v1849
    %v1851 = vsub.f32 %v1805, %v1850
    %v1852 = vsub.f32 %v1808, %v1850
    %v1853 = vsub.f32 %v1835, %v1850
    %v1854 = vrcp.pop %v1853
    %v1855 = vmul.f32 %v1853, %v1854
    %v1856 = vsub.f32 1.0, %v1855
    %v1857 = vmul.f32 %v1854, %v1856
    %v1858 = vadd.f32 %v1854, %v1857
    %vm1859 = vweird.f32 %v1853
    %vm1860 = vweird.f32 %v1854
    %vm1861 = vmor %vm1859, %vm1860
    %v1862 = vsel %vm1861, %v1854, %v1858
    %v1863 = vand.u32 2147483647, %v1853
    %vm1864 = vcmp.eq.f32.partialorder %v1863, 8.507059e+37
    %v1865 = vand.u32 %v1853, 2147483648
    %v1866 = vor.u32 1.1754944e-38, %v1865
    %v1867 = vsel %vm1864, %v1866, %v1862
    %v1868 = vmul.f32 %v1851, %v1867
    %v1869 = vmul.f32 %v1852, %v1867
    %1870 = vst.msk [vmem:[%s24] sm:$0xff] %vm1822, %v1868
    %1871 = vst.msk [vmem:[%s24 + $0x8] sm:$0xff] %vm1822, %v1869
    // Predicated region
    $region166: #{tpu_custom_call.1} parent=1 // pred_check
      _
    $region167: #{tpu_custom_call.1} parent=1 // pred_check_branch
      %1873 = sbr.rel (0) target = $region169
    $region168: #{tpu_custom_call.1} parent=1 // pred_region
      _
    $region169: #{tpu_custom_call.1} parent=1 // pred_fallthru
      _
    // Predicated region
    $region170: #{tpu_custom_call.1} parent=1 // pred_check
      _
    $region171: #{tpu_custom_call.1} parent=1 // pred_check_branch
      %1875 = sbr.rel (0) target = $region173
    $region172: #{tpu_custom_call.1} parent=1 // pred_region
      _
    $region173: #{tpu_custom_call.1} parent=1 // pred_fallthru
      _
    %1876 = vsyncpa [#allocation3], 1
    %1877 = vsyncpa [#allocation5], 1
    %1878 = vsyncpa [#allocation8], 1
    %1879 = vsyncpa [#allocation11], 1
    %1880 = vsyncpa [#allocation14], 1
    %1881 = vsyncpa [#allocation17], 1
    %1882 = vsyncpa [#allocation20], 1
    %1883 = vsyncpa [#allocation23], 1
    %1884 = vsyncpa [#allocation26], 1

</llo_original>
